<compile_context>
chip_gen: v5e
topology: v5e:2x2
jax: 0.10.0
libtpu: 0.0.40
codegen_flags: <defaults>
</compile_context>

<pallas_src>
import functools

import numpy as np
import jax
import jax.numpy as jnp
from jax import lax
from jax.experimental import pallas as pl
from jax.experimental.pallas import tpu as pltpu


KH = KW = 3
STRIDE = 2
PAD = 1

TASKS = ("normals", "depth")
TASK_OUT_CHANNELS = {"normals": 3, "depth": 1}
# get_outfns(tasks) equivalent: surface normals are L2-normalized channel-wise,
# everything else is identity.
_OUTFNS = {"normals": "normalize"}


# ----------------------------------------------------------------------------
# Constant operators (compile-time constants under jit; built once per shape)
# ----------------------------------------------------------------------------
def _conv_gather_matrices(h_in, w_in):
    """(9, h_in*w_in, h_out*w_out) 0/1 gather operators, one per 3x3 tap.

    G[t, p_in, p_out] == 1 iff input pixel p_in feeds tap t of output pixel
    p_out for a 3x3 / stride-2 / pad-1 conv (zero padding == all-zero column).
    """
    h_out = (h_in + 2 * PAD - KH) // STRIDE + 1
    w_out = (w_in + 2 * PAD - KW) // STRIDE + 1
    g = np.zeros((KH * KW, h_in * w_in, h_out * w_out), np.float32)
    for di in range(KH):
        for dj in range(KW):
            t = di * KW + dj
            for ho in range(h_out):
                hi = STRIDE * ho + di - PAD
                if hi < 0 or hi >= h_in:
                    continue
                for wo in range(w_out):
                    wi = STRIDE * wo + dj - PAD
                    if wi < 0 or wi >= w_in:
                        continue
                    g[t, hi * w_in + wi, ho * w_out + wo] = 1.0
    return jnp.asarray(g), (h_out, w_out)


def _bilinear_matrix(out_size, in_size):
    """1-D F.interpolate(mode='bilinear', align_corners=True) operator (out, in)."""
    if in_size == out_size:
        return np.eye(out_size, dtype=np.float32)
    if out_size == 1:
        m = np.zeros((1, in_size), np.float32)
        m[0, 0] = 1.0  # align_corners=True with a single output picks source 0
        return m
    if in_size == 1:
        return np.ones((out_size, 1), np.float32)
    m = np.zeros((out_size, in_size), np.float32)
    for i in range(out_size):
        src = i * (in_size - 1) / (out_size - 1)
        lo = min(int(np.floor(src)), in_size - 2)
        frac = src - lo
        m[i, lo] += 1.0 - frac
        m[i, lo + 1] += frac
    return m


# ----------------------------------------------------------------------------
# Fused Pallas kernel: backbone + all decoders + upsample + out-fns, per image
# ----------------------------------------------------------------------------
def _fused_forward_kernel(x_ref, g1_ref, g2_ref, up_ref,
                          w1_ref, b1_ref, w2_ref, b2_ref,
                          *rest, n_tasks, task_outfns):
    dec_refs = rest[:2 * n_tasks]              # per task: (wd, bd)
    out_refs = rest[2 * n_tasks:3 * n_tasks]   # per task: output (1, Ct, H*W)
    feat_ref = rest[3 * n_tasks]               # shared features (1, C1, Hf*Wf)

    f32 = jnp.float32
    x = x_ref[0]                               # (Cin, H*W) — pixels on lanes

    c1 = w1_ref.shape[1]
    hw1 = g1_ref.shape[2]
    hw2 = g2_ref.shape[2]

    # ---- backbone conv1: 3x3 s2 p1 (Cin -> C1) + ReLU -----------------------
    y1 = jnp.zeros((c1, hw1), f32)
    for t in range(KH * KW):
        patch = jnp.dot(x, g1_ref[t], preferred_element_type=f32)        # (Cin, hw1)
        y1 = y1 + jnp.dot(w1_ref[t], patch, preferred_element_type=f32)  # (C1, hw1)
    y1 = jnp.maximum(y1 + b1_ref[...], 0.0)

    # ---- backbone conv2: 3x3 s2 p1 (C1 -> C1) + ReLU ------------------------
    y2 = jnp.zeros((c1, hw2), f32)
    for t in range(KH * KW):
        patch = jnp.dot(y1, g2_ref[t], preferred_element_type=f32)       # (C1, hw2)
        y2 = y2 + jnp.dot(w2_ref[t], patch, preferred_element_type=f32)  # (C1, hw2)
    feats = jnp.maximum(y2 + b2_ref[...], 0.0)
    feat_ref[0] = feats.astype(feat_ref.dtype)

    # ---- per-task decoder (1x1 conv) + bilinear upsample + out-fn -----------
    for k in range(n_tasks):
        wd = dec_refs[2 * k][...]                                        # (Ct, C1)
        bd = dec_refs[2 * k + 1][...]                                    # (Ct, 1)
        d = jnp.dot(wd, feats, preferred_element_type=f32) + bd          # (Ct, hw2)
        u = jnp.dot(d, up_ref[...], preferred_element_type=f32)          # (Ct, H*W)
        if task_outfns[k] == "normalize":
            # x / max(||x||_2, 1e-12)  ==  x * rsqrt(max(sum(x^2), 1e-24))
            ss = jnp.sum(u * u, axis=0, keepdims=True)                   # (1, H*W)
            u = u * lax.rsqrt(jnp.maximum(ss, 1e-24))                    # EUP rsqrt
        out_refs[k][0] = u.astype(out_refs[k].dtype)


# ----------------------------------------------------------------------------
# Wrapper: MultiTaskModel.forward(x, feat=False)
# ----------------------------------------------------------------------------
def multi_task_forward(params, x_nchw, tasks=TASKS, feat=False):
    N, cin, H, W = x_nchw.shape
    bb = params["backbone"]
    c1 = bb["w1"].shape[0]

    g1, (h1, w1sp) = _conv_gather_matrices(H, W)
    g2, (h2, w2sp) = _conv_gather_matrices(h1, w1sp)
    hw, hw1, hw2 = H * W, h1 * w1sp, h2 * w2sp

    # Upsample operator (skipped — identity — if backbone keeps the spatial size,
    # mirroring the `shared_representation.size()[2:] == out_size` branch).
    if (h2, w2sp) == (H, W):
        up_t = jnp.eye(hw2, dtype=jnp.float32)
    else:
        ah = _bilinear_matrix(H, h2)
        aw = _bilinear_matrix(W, w2sp)
        up_t = jnp.asarray(np.kron(ah, aw).T)                       # (hw2, hw)

    # PyTorch Conv2d weights (Cout, Cin, kh, kw) -> per-tap (9, Cout, Cin)
    w1_taps = jnp.transpose(bb["w1"], (2, 3, 0, 1)).reshape(KH * KW, c1, cin)
    w2_taps = jnp.transpose(bb["w2"], (2, 3, 0, 1)).reshape(KH * KW, c1, c1)
    b1 = bb["b1"].reshape(c1, 1)
    b2 = bb["b2"].reshape(c1, 1)

    task_channels = tuple(params["decoders"][t]["w"].shape[0] for t in tasks)
    task_outfns = tuple(_OUTFNS.get(t, "identity") for t in tasks)

    dec_args = []
    for t in tasks:
        wd = params["decoders"][t]["w"]
        ct = wd.shape[0]
        dec_args.append(wd.reshape(ct, c1))       # 1x1 conv == (Ct, C1) matmul
        dec_args.append(params["decoders"][t]["b"].reshape(ct, 1))

    x_flat = x_nchw.reshape(N, cin, hw)           # (N, C, H*W): pixels on lanes

    def const_spec(shape):
        return pl.BlockSpec(shape, lambda i: (0,) * len(shape))

    in_specs = [
        pl.BlockSpec((1, cin, hw), lambda i: (i, 0, 0)),   # one image per grid step
        const_spec((KH * KW, hw, hw1)),                    # conv1 gather taps
        const_spec((KH * KW, hw1, hw2)),                   # conv2 gather taps
        const_spec((hw2, hw)),                             # bilinear operator^T
        const_spec((KH * KW, c1, cin)),
        const_spec((c1, 1)),
        const_spec((KH * KW, c1, c1)),
        const_spec((c1, 1)),
    ]
    for ct in task_channels:
        in_specs.append(const_spec((ct, c1)))
        in_specs.append(const_spec((ct, 1)))

    out_shape = tuple(jax.ShapeDtypeStruct((N, ct, hw), jnp.float32)
                      for ct in task_channels)
    out_shape = out_shape + (jax.ShapeDtypeStruct((N, c1, hw2), jnp.float32),)
    out_specs = tuple(pl.BlockSpec((1, ct, hw), lambda i: (i, 0, 0))
                      for ct in task_channels)
    out_specs = out_specs + (pl.BlockSpec((1, c1, hw2), lambda i: (i, 0, 0)),)

    kern = functools.partial(_fused_forward_kernel,
                             n_tasks=len(tasks), task_outfns=task_outfns)

    results = pl.pallas_call(
        kern,
        grid=(N,),
        in_specs=in_specs,
        out_specs=out_specs,
        out_shape=out_shape,
        compiler_params=pltpu.CompilerParams(dimension_semantics=("parallel",)),
    )(x_flat, g1, g2, up_t, w1_taps, b1, w2_taps, b2, *dec_args)

    outs = {t: results[k].reshape(N, task_channels[k], H, W)
            for k, t in enumerate(tasks)}
    feats_out = results[len(tasks)].reshape(N, c1, h2, w2sp)
    if feat:
        return outs, feats_out
    return outs


# ----------------------------------------------------------------------------
# Parameters (PyTorch layouts) and pure-JAX reference for validation
# ----------------------------------------------------------------------------
def init_params(key, tasks, in_ch=3, hidden=8):
    keys = jax.random.split(key, 4 + 2 * len(tasks))
    s = 0.1
    params = {
        "backbone": {
            "w1": s * jax.random.normal(keys[0], (hidden, in_ch, 3, 3), jnp.float32),
            "b1": s * jax.random.normal(keys[1], (hidden,), jnp.float32),
            "w2": s * jax.random.normal(keys[2], (hidden, hidden, 3, 3), jnp.float32),
            "b2": s * jax.random.normal(keys[3], (hidden,), jnp.float32),
        },
        "decoders": {},
    }
    for i, task in enumerate(tasks):
        ct = TASK_OUT_CHANNELS[task]
        params["decoders"][task] = {
            "w": s * jax.random.normal(keys[4 + 2 * i], (ct, hidden, 1, 1), jnp.float32),
            "b": s * jax.random.normal(keys[5 + 2 * i], (ct,), jnp.float32),
        }
    return params


def _reference_forward(params, x, tasks, feat=False):
    bb = params["backbone"]
    dn = ("NCHW", "OIHW", "NCHW")
    f1 = lax.conv_general_dilated(x, bb["w1"], (2, 2), ((1, 1), (1, 1)),
                                  dimension_numbers=dn)
    f1 = jnp.maximum(f1 + bb["b1"][None, :, None, None], 0.0)
    f2 = lax.conv_general_dilated(f1, bb["w2"], (2, 2), ((1, 1), (1, 1)),
                                  dimension_numbers=dn)
    feats = jnp.maximum(f2 + bb["b2"][None, :, None, None], 0.0)

    H, W = x.shape[2], x.shape[3]
    hf, wf = feats.shape[2], feats.shape[3]
    ah = jnp.asarray(_bilinear_matrix(H, hf))
    aw = jnp.asarray(_bilinear_matrix(W, wf))

    outs = {}
    for task in tasks:
        wd = params["decoders"][task]["w"][:, :, 0, 0]
        bd = params["decoders"][task]["b"]
        d = jnp.einsum("oc,nchw->nohw", wd, feats) + bd[None, :, None, None]
        if (hf, wf) != (H, W):
            d = jnp.einsum("Hh,nchw,Ww->ncHW", ah, d, aw)
        if _OUTFNS.get(task, "identity") == "normalize":
            nrm = jnp.sqrt(jnp.sum(d * d, axis=1, keepdims=True))
            d = d / jnp.maximum(nrm, 1e-12)
        outs[task] = d
    if feat:
        return outs, feats
    return outs


if __name__ == "__main__":
    key = jax.random.PRNGKey(0)
    kx, kp = jax.random.split(key)
    x = jax.random.normal(kx, (2, 3, 16, 16), jnp.float32)     # NCHW like PyTorch
    params = init_params(kp, TASKS, in_ch=3, hidden=8)

    outs, feats = multi_task_forward(params, x, tasks=TASKS, feat=True)
    outs, feats = jax.block_until_ready((outs, feats))

    ref_outs, ref_feats = _reference_forward(params, x, TASKS, feat=True)

    assert feats.shape == (2, 8, 4, 4)
    assert bool(jnp.allclose(feats, ref_feats, rtol=2e-3, atol=2e-3))
    for task in TASKS:
        ct = TASK_OUT_CHANNELS[task]
        assert outs[task].shape == (2, ct, 16, 16)
        assert bool(jnp.all(jnp.isfinite(outs[task])))
        assert bool(jnp.allclose(outs[task], ref_outs[task], rtol=2e-3, atol=2e-3))

    print("KERNEL_OK")
</pallas_src>

<mosaic_0001>
module attributes {stable_mosaic.version = 11 : i64} {
  func.func @_fused_forward_kernel(%arg0: i32, %arg1: memref<1x3x256xf32, #tpu.memory_space<vmem>>, %arg2: memref<9x256x64xf32, #tpu.memory_space<vmem>>, %arg3: memref<9x64x16xf32, #tpu.memory_space<vmem>>, %arg4: memref<16x256xf32, #tpu.memory_space<vmem>>, %arg5: memref<9x8x3xf32, #tpu.memory_space<vmem>>, %arg6: memref<8x1xf32, #tpu.memory_space<vmem>>, %arg7: memref<9x8x8xf32, #tpu.memory_space<vmem>>, %arg8: memref<8x1xf32, #tpu.memory_space<vmem>>, %arg9: memref<3x8xf32, #tpu.memory_space<vmem>>, %arg10: memref<3x1xf32, #tpu.memory_space<vmem>>, %arg11: memref<1x8xf32, #tpu.memory_space<vmem>>, %arg12: memref<1x1xf32, #tpu.memory_space<vmem>>, %arg13: memref<1x3x256xf32, #tpu.memory_space<vmem>>, %arg14: memref<1x1x256xf32, #tpu.memory_space<vmem>>, %arg15: memref<1x8x16xf32, #tpu.memory_space<vmem>>) attributes {dimension_semantics = [#tpu.dimension_semantics<parallel>], iteration_bounds = array<i64: 2>, scalar_prefetch = 0 : i64, scratch_operands = 0 : i64, tpu.core_type = #tpu.core_type<tc>, window_params = [{transform_indices = @transform_0, window_bounds = array<i64: 1, 3, 256>}, {pipeline_mode = #tpu.pipeline_mode<synchronous>, transform_indices = @transform_1, window_bounds = array<i64: 9, 256, 64>}, {pipeline_mode = #tpu.pipeline_mode<synchronous>, transform_indices = @transform_2, window_bounds = array<i64: 9, 64, 16>}, {pipeline_mode = #tpu.pipeline_mode<synchronous>, transform_indices = @transform_3, window_bounds = array<i64: 16, 256>}, {pipeline_mode = #tpu.pipeline_mode<synchronous>, transform_indices = @transform_4, window_bounds = array<i64: 9, 8, 3>}, {pipeline_mode = #tpu.pipeline_mode<synchronous>, transform_indices = @transform_5, window_bounds = array<i64: 8, 1>}, {pipeline_mode = #tpu.pipeline_mode<synchronous>, transform_indices = @transform_6, window_bounds = array<i64: 9, 8, 8>}, {pipeline_mode = #tpu.pipeline_mode<synchronous>, transform_indices = @transform_7, window_bounds = array<i64: 8, 1>}, {pipeline_mode = #tpu.pipeline_mode<synchronous>, transform_indices = @transform_8, window_bounds = array<i64: 3, 8>}, {pipeline_mode = #tpu.pipeline_mode<synchronous>, transform_indices = @transform_9, window_bounds = array<i64: 3, 1>}, {pipeline_mode = #tpu.pipeline_mode<synchronous>, transform_indices = @transform_10, window_bounds = array<i64: 1, 8>}, {pipeline_mode = #tpu.pipeline_mode<synchronous>, transform_indices = @transform_11, window_bounds = array<i64: 1, 1>}, {transform_indices = @transform_12, window_bounds = array<i64: 1, 3, 256>}, {transform_indices = @transform_13, window_bounds = array<i64: 1, 1, 256>}, {transform_indices = @transform_14, window_bounds = array<i64: 1, 8, 16>}]} {
    %c0 = arith.constant 0 : index
    %c0_0 = arith.constant 0 : index
    %c0_1 = arith.constant 0 : index
    %0 = vector.load %arg1[%c0, %c0_0, %c0_1] : memref<1x3x256xf32, #tpu.memory_space<vmem>>, vector<1x3x256xf32>
    %1 = vector.shape_cast %0 : vector<1x3x256xf32> to vector<3x256xf32>
    %cst = arith.constant 0.000000e+00 : f32
    %2 = vector.broadcast %cst : f32 to vector<8x64xf32>
    %c0_2 = arith.constant 0 : index
    %c0_3 = arith.constant 0 : index
    %c0_4 = arith.constant 0 : index
    %3 = vector.load %arg2[%c0_2, %c0_3, %c0_4] : memref<9x256x64xf32, #tpu.memory_space<vmem>>, vector<1x256x64xf32>
    %4 = vector.shape_cast %3 : vector<1x256x64xf32> to vector<256x64xf32>
    %cst_5 = arith.constant dense<0.000000e+00> : vector<3x64xf32>
    %5 = tpu.matmul %1, %4, %cst_5 {dimension_numbers = #tpu.dot_dimension_numbers<[1], [0], [0], [1], [0, 0, 1, 1], [], []>} : vector<3x256xf32>, vector<256x64xf32>, vector<3x64xf32> -> vector<3x64xf32>
    %c0_6 = arith.constant 0 : index
    %c0_7 = arith.constant 0 : index
    %c0_8 = arith.constant 0 : index
    %6 = vector.load %arg5[%c0_6, %c0_7, %c0_8] : memref<9x8x3xf32, #tpu.memory_space<vmem>>, vector<1x8x3xf32>
    %7 = vector.shape_cast %6 : vector<1x8x3xf32> to vector<8x3xf32>
    %cst_9 = arith.constant dense<0.000000e+00> : vector<8x64xf32>
    %8 = tpu.matmul %7, %5, %cst_9 {dimension_numbers = #tpu.dot_dimension_numbers<[1], [0], [0], [1], [0, 0, 1, 1], [], []>} : vector<8x3xf32>, vector<3x64xf32>, vector<8x64xf32> -> vector<8x64xf32>
    %9 = arith.addf %2, %8 : vector<8x64xf32>
    %c1 = arith.constant 1 : index
    %c0_10 = arith.constant 0 : index
    %c0_11 = arith.constant 0 : index
    %10 = vector.load %arg2[%c1, %c0_10, %c0_11] : memref<9x256x64xf32, #tpu.memory_space<vmem>>, vector<1x256x64xf32>
    %11 = vector.shape_cast %10 : vector<1x256x64xf32> to vector<256x64xf32>
    %cst_12 = arith.constant dense<0.000000e+00> : vector<3x64xf32>
    %12 = tpu.matmul %1, %11, %cst_12 {dimension_numbers = #tpu.dot_dimension_numbers<[1], [0], [0], [1], [0, 0, 1, 1], [], []>} : vector<3x256xf32>, vector<256x64xf32>, vector<3x64xf32> -> vector<3x64xf32>
    %c1_13 = arith.constant 1 : index
    %c0_14 = arith.constant 0 : index
    %c0_15 = arith.constant 0 : index
    %13 = vector.load %arg5[%c1_13, %c0_14, %c0_15] : memref<9x8x3xf32, #tpu.memory_space<vmem>>, vector<1x8x3xf32>
    %14 = vector.shape_cast %13 : vector<1x8x3xf32> to vector<8x3xf32>
    %cst_16 = arith.constant dense<0.000000e+00> : vector<8x64xf32>
    %15 = tpu.matmul %14, %12, %cst_16 {dimension_numbers = #tpu.dot_dimension_numbers<[1], [0], [0], [1], [0, 0, 1, 1], [], []>} : vector<8x3xf32>, vector<3x64xf32>, vector<8x64xf32> -> vector<8x64xf32>
    %16 = arith.addf %9, %15 : vector<8x64xf32>
    %c2 = arith.constant 2 : index
    %c0_17 = arith.constant 0 : index
    %c0_18 = arith.constant 0 : index
    %17 = vector.load %arg2[%c2, %c0_17, %c0_18] : memref<9x256x64xf32, #tpu.memory_space<vmem>>, vector<1x256x64xf32>
    %18 = vector.shape_cast %17 : vector<1x256x64xf32> to vector<256x64xf32>
    %cst_19 = arith.constant dense<0.000000e+00> : vector<3x64xf32>
    %19 = tpu.matmul %1, %18, %cst_19 {dimension_numbers = #tpu.dot_dimension_numbers<[1], [0], [0], [1], [0, 0, 1, 1], [], []>} : vector<3x256xf32>, vector<256x64xf32>, vector<3x64xf32> -> vector<3x64xf32>
    %c2_20 = arith.constant 2 : index
    %c0_21 = arith.constant 0 : index
    %c0_22 = arith.constant 0 : index
    %20 = vector.load %arg5[%c2_20, %c0_21, %c0_22] : memref<9x8x3xf32, #tpu.memory_space<vmem>>, vector<1x8x3xf32>
    %21 = vector.shape_cast %20 : vector<1x8x3xf32> to vector<8x3xf32>
    %cst_23 = arith.constant dense<0.000000e+00> : vector<8x64xf32>
    %22 = tpu.matmul %21, %19, %cst_23 {dimension_numbers = #tpu.dot_dimension_numbers<[1], [0], [0], [1], [0, 0, 1, 1], [], []>} : vector<8x3xf32>, vector<3x64xf32>, vector<8x64xf32> -> vector<8x64xf32>
    %23 = arith.addf %16, %22 : vector<8x64xf32>
    %c3 = arith.constant 3 : index
    %c0_24 = arith.constant 0 : index
    %c0_25 = arith.constant 0 : index
    %24 = vector.load %arg2[%c3, %c0_24, %c0_25] : memref<9x256x64xf32, #tpu.memory_space<vmem>>, vector<1x256x64xf32>
    %25 = vector.shape_cast %24 : vector<1x256x64xf32> to vector<256x64xf32>
    %cst_26 = arith.constant dense<0.000000e+00> : vector<3x64xf32>
    %26 = tpu.matmul %1, %25, %cst_26 {dimension_numbers = #tpu.dot_dimension_numbers<[1], [0], [0], [1], [0, 0, 1, 1], [], []>} : vector<3x256xf32>, vector<256x64xf32>, vector<3x64xf32> -> vector<3x64xf32>
    %c3_27 = arith.constant 3 : index
    %c0_28 = arith.constant 0 : index
    %c0_29 = arith.constant 0 : index
    %27 = vector.load %arg5[%c3_27, %c0_28, %c0_29] : memref<9x8x3xf32, #tpu.memory_space<vmem>>, vector<1x8x3xf32>
    %28 = vector.shape_cast %27 : vector<1x8x3xf32> to vector<8x3xf32>
    %cst_30 = arith.constant dense<0.000000e+00> : vector<8x64xf32>
    %29 = tpu.matmul %28, %26, %cst_30 {dimension_numbers = #tpu.dot_dimension_numbers<[1], [0], [0], [1], [0, 0, 1, 1], [], []>} : vector<8x3xf32>, vector<3x64xf32>, vector<8x64xf32> -> vector<8x64xf32>
    %30 = arith.addf %23, %29 : vector<8x64xf32>
    %c4 = arith.constant 4 : index
    %c0_31 = arith.constant 0 : index
    %c0_32 = arith.constant 0 : index
    %31 = vector.load %arg2[%c4, %c0_31, %c0_32] : memref<9x256x64xf32, #tpu.memory_space<vmem>>, vector<1x256x64xf32>
    %32 = vector.shape_cast %31 : vector<1x256x64xf32> to vector<256x64xf32>
    %cst_33 = arith.constant dense<0.000000e+00> : vector<3x64xf32>
    %33 = tpu.matmul %1, %32, %cst_33 {dimension_numbers = #tpu.dot_dimension_numbers<[1], [0], [0], [1], [0, 0, 1, 1], [], []>} : vector<3x256xf32>, vector<256x64xf32>, vector<3x64xf32> -> vector<3x64xf32>
    %c4_34 = arith.constant 4 : index
    %c0_35 = arith.constant 0 : index
    %c0_36 = arith.constant 0 : index
    %34 = vector.load %arg5[%c4_34, %c0_35, %c0_36] : memref<9x8x3xf32, #tpu.memory_space<vmem>>, vector<1x8x3xf32>
    %35 = vector.shape_cast %34 : vector<1x8x3xf32> to vector<8x3xf32>
    %cst_37 = arith.constant dense<0.000000e+00> : vector<8x64xf32>
    %36 = tpu.matmul %35, %33, %cst_37 {dimension_numbers = #tpu.dot_dimension_numbers<[1], [0], [0], [1], [0, 0, 1, 1], [], []>} : vector<8x3xf32>, vector<3x64xf32>, vector<8x64xf32> -> vector<8x64xf32>
    %37 = arith.addf %30, %36 : vector<8x64xf32>
    %c5 = arith.constant 5 : index
    %c0_38 = arith.constant 0 : index
    %c0_39 = arith.constant 0 : index
    %38 = vector.load %arg2[%c5, %c0_38, %c0_39] : memref<9x256x64xf32, #tpu.memory_space<vmem>>, vector<1x256x64xf32>
    %39 = vector.shape_cast %38 : vector<1x256x64xf32> to vector<256x64xf32>
    %cst_40 = arith.constant dense<0.000000e+00> : vector<3x64xf32>
    %40 = tpu.matmul %1, %39, %cst_40 {dimension_numbers = #tpu.dot_dimension_numbers<[1], [0], [0], [1], [0, 0, 1, 1], [], []>} : vector<3x256xf32>, vector<256x64xf32>, vector<3x64xf32> -> vector<3x64xf32>
    %c5_41 = arith.constant 5 : index
    %c0_42 = arith.constant 0 : index
    %c0_43 = arith.constant 0 : index
    %41 = vector.load %arg5[%c5_41, %c0_42, %c0_43] : memref<9x8x3xf32, #tpu.memory_space<vmem>>, vector<1x8x3xf32>
    %42 = vector.shape_cast %41 : vector<1x8x3xf32> to vector<8x3xf32>
    %cst_44 = arith.constant dense<0.000000e+00> : vector<8x64xf32>
    %43 = tpu.matmul %42, %40, %cst_44 {dimension_numbers = #tpu.dot_dimension_numbers<[1], [0], [0], [1], [0, 0, 1, 1], [], []>} : vector<8x3xf32>, vector<3x64xf32>, vector<8x64xf32> -> vector<8x64xf32>
    %44 = arith.addf %37, %43 : vector<8x64xf32>
    %c6 = arith.constant 6 : index
    %c0_45 = arith.constant 0 : index
    %c0_46 = arith.constant 0 : index
    %45 = vector.load %arg2[%c6, %c0_45, %c0_46] : memref<9x256x64xf32, #tpu.memory_space<vmem>>, vector<1x256x64xf32>
    %46 = vector.shape_cast %45 : vector<1x256x64xf32> to vector<256x64xf32>
    %cst_47 = arith.constant dense<0.000000e+00> : vector<3x64xf32>
    %47 = tpu.matmul %1, %46, %cst_47 {dimension_numbers = #tpu.dot_dimension_numbers<[1], [0], [0], [1], [0, 0, 1, 1], [], []>} : vector<3x256xf32>, vector<256x64xf32>, vector<3x64xf32> -> vector<3x64xf32>
    %c6_48 = arith.constant 6 : index
    %c0_49 = arith.constant 0 : index
    %c0_50 = arith.constant 0 : index
    %48 = vector.load %arg5[%c6_48, %c0_49, %c0_50] : memref<9x8x3xf32, #tpu.memory_space<vmem>>, vector<1x8x3xf32>
    %49 = vector.shape_cast %48 : vector<1x8x3xf32> to vector<8x3xf32>
    %cst_51 = arith.constant dense<0.000000e+00> : vector<8x64xf32>
    %50 = tpu.matmul %49, %47, %cst_51 {dimension_numbers = #tpu.dot_dimension_numbers<[1], [0], [0], [1], [0, 0, 1, 1], [], []>} : vector<8x3xf32>, vector<3x64xf32>, vector<8x64xf32> -> vector<8x64xf32>
    %51 = arith.addf %44, %50 : vector<8x64xf32>
    %c7 = arith.constant 7 : index
    %c0_52 = arith.constant 0 : index
    %c0_53 = arith.constant 0 : index
    %52 = vector.load %arg2[%c7, %c0_52, %c0_53] : memref<9x256x64xf32, #tpu.memory_space<vmem>>, vector<1x256x64xf32>
    %53 = vector.shape_cast %52 : vector<1x256x64xf32> to vector<256x64xf32>
    %cst_54 = arith.constant dense<0.000000e+00> : vector<3x64xf32>
    %54 = tpu.matmul %1, %53, %cst_54 {dimension_numbers = #tpu.dot_dimension_numbers<[1], [0], [0], [1], [0, 0, 1, 1], [], []>} : vector<3x256xf32>, vector<256x64xf32>, vector<3x64xf32> -> vector<3x64xf32>
    %c7_55 = arith.constant 7 : index
    %c0_56 = arith.constant 0 : index
    %c0_57 = arith.constant 0 : index
    %55 = vector.load %arg5[%c7_55, %c0_56, %c0_57] : memref<9x8x3xf32, #tpu.memory_space<vmem>>, vector<1x8x3xf32>
    %56 = vector.shape_cast %55 : vector<1x8x3xf32> to vector<8x3xf32>
    %cst_58 = arith.constant dense<0.000000e+00> : vector<8x64xf32>
    %57 = tpu.matmul %56, %54, %cst_58 {dimension_numbers = #tpu.dot_dimension_numbers<[1], [0], [0], [1], [0, 0, 1, 1], [], []>} : vector<8x3xf32>, vector<3x64xf32>, vector<8x64xf32> -> vector<8x64xf32>
    %58 = arith.addf %51, %57 : vector<8x64xf32>
    %c8 = arith.constant 8 : index
    %c0_59 = arith.constant 0 : index
    %c0_60 = arith.constant 0 : index
    %59 = vector.load %arg2[%c8, %c0_59, %c0_60] : memref<9x256x64xf32, #tpu.memory_space<vmem>>, vector<1x256x64xf32>
    %60 = vector.shape_cast %59 : vector<1x256x64xf32> to vector<256x64xf32>
    %cst_61 = arith.constant dense<0.000000e+00> : vector<3x64xf32>
    %61 = tpu.matmul %1, %60, %cst_61 {dimension_numbers = #tpu.dot_dimension_numbers<[1], [0], [0], [1], [0, 0, 1, 1], [], []>} : vector<3x256xf32>, vector<256x64xf32>, vector<3x64xf32> -> vector<3x64xf32>
    %c8_62 = arith.constant 8 : index
    %c0_63 = arith.constant 0 : index
    %c0_64 = arith.constant 0 : index
    %62 = vector.load %arg5[%c8_62, %c0_63, %c0_64] : memref<9x8x3xf32, #tpu.memory_space<vmem>>, vector<1x8x3xf32>
    %63 = vector.shape_cast %62 : vector<1x8x3xf32> to vector<8x3xf32>
    %cst_65 = arith.constant dense<0.000000e+00> : vector<8x64xf32>
    %64 = tpu.matmul %63, %61, %cst_65 {dimension_numbers = #tpu.dot_dimension_numbers<[1], [0], [0], [1], [0, 0, 1, 1], [], []>} : vector<8x3xf32>, vector<3x64xf32>, vector<8x64xf32> -> vector<8x64xf32>
    %65 = arith.addf %58, %64 : vector<8x64xf32>
    %c0_66 = arith.constant 0 : index
    %c0_67 = arith.constant 0 : index
    %66 = vector.load %arg6[%c0_66, %c0_67] : memref<8x1xf32, #tpu.memory_space<vmem>>, vector<8x1xf32>
    %67 = vector.broadcast %66 : vector<8x1xf32> to vector<8x64xf32>
    %68 = arith.addf %65, %67 : vector<8x64xf32>
    %cst_68 = arith.constant 0.000000e+00 : f32
    %69 = vector.broadcast %cst_68 : f32 to vector<8x64xf32>
    %70 = arith.maximumf %68, %69 : vector<8x64xf32>
    %cst_69 = arith.constant 0.000000e+00 : f32
    %71 = vector.broadcast %cst_69 : f32 to vector<8x16xf32>
    %c0_70 = arith.constant 0 : index
    %c0_71 = arith.constant 0 : index
    %c0_72 = arith.constant 0 : index
    %72 = vector.load %arg3[%c0_70, %c0_71, %c0_72] : memref<9x64x16xf32, #tpu.memory_space<vmem>>, vector<1x64x16xf32>
    %73 = vector.shape_cast %72 : vector<1x64x16xf32> to vector<64x16xf32>
    %cst_73 = arith.constant dense<0.000000e+00> : vector<8x16xf32>
    %74 = tpu.matmul %70, %73, %cst_73 {dimension_numbers = #tpu.dot_dimension_numbers<[1], [0], [0], [1], [0, 0, 1, 1], [], []>} : vector<8x64xf32>, vector<64x16xf32>, vector<8x16xf32> -> vector<8x16xf32>
    %c0_74 = arith.constant 0 : index
    %c0_75 = arith.constant 0 : index
    %c0_76 = arith.constant 0 : index
    %75 = vector.load %arg7[%c0_74, %c0_75, %c0_76] : memref<9x8x8xf32, #tpu.memory_space<vmem>>, vector<1x8x8xf32>
    %76 = vector.shape_cast %75 : vector<1x8x8xf32> to vector<8x8xf32>
    %cst_77 = arith.constant dense<0.000000e+00> : vector<8x16xf32>
    %77 = tpu.matmul %76, %74, %cst_77 {dimension_numbers = #tpu.dot_dimension_numbers<[1], [0], [0], [1], [0, 0, 1, 1], [], []>} : vector<8x8xf32>, vector<8x16xf32>, vector<8x16xf32> -> vector<8x16xf32>
    %78 = arith.addf %71, %77 : vector<8x16xf32>
    %c1_78 = arith.constant 1 : index
    %c0_79 = arith.constant 0 : index
    %c0_80 = arith.constant 0 : index
    %79 = vector.load %arg3[%c1_78, %c0_79, %c0_80] : memref<9x64x16xf32, #tpu.memory_space<vmem>>, vector<1x64x16xf32>
    %80 = vector.shape_cast %79 : vector<1x64x16xf32> to vector<64x16xf32>
    %cst_81 = arith.constant dense<0.000000e+00> : vector<8x16xf32>
    %81 = tpu.matmul %70, %80, %cst_81 {dimension_numbers = #tpu.dot_dimension_numbers<[1], [0], [0], [1], [0, 0, 1, 1], [], []>} : vector<8x64xf32>, vector<64x16xf32>, vector<8x16xf32> -> vector<8x16xf32>
    %c1_82 = arith.constant 1 : index
    %c0_83 = arith.constant 0 : index
    %c0_84 = arith.constant 0 : index
    %82 = vector.load %arg7[%c1_82, %c0_83, %c0_84] : memref<9x8x8xf32, #tpu.memory_space<vmem>>, vector<1x8x8xf32>
    %83 = vector.shape_cast %82 : vector<1x8x8xf32> to vector<8x8xf32>
    %cst_85 = arith.constant dense<0.000000e+00> : vector<8x16xf32>
    %84 = tpu.matmul %83, %81, %cst_85 {dimension_numbers = #tpu.dot_dimension_numbers<[1], [0], [0], [1], [0, 0, 1, 1], [], []>} : vector<8x8xf32>, vector<8x16xf32>, vector<8x16xf32> -> vector<8x16xf32>
    %85 = arith.addf %78, %84 : vector<8x16xf32>
    %c2_86 = arith.constant 2 : index
    %c0_87 = arith.constant 0 : index
    %c0_88 = arith.constant 0 : index
    %86 = vector.load %arg3[%c2_86, %c0_87, %c0_88] : memref<9x64x16xf32, #tpu.memory_space<vmem>>, vector<1x64x16xf32>
    %87 = vector.shape_cast %86 : vector<1x64x16xf32> to vector<64x16xf32>
    %cst_89 = arith.constant dense<0.000000e+00> : vector<8x16xf32>
    %88 = tpu.matmul %70, %87, %cst_89 {dimension_numbers = #tpu.dot_dimension_numbers<[1], [0], [0], [1], [0, 0, 1, 1], [], []>} : vector<8x64xf32>, vector<64x16xf32>, vector<8x16xf32> -> vector<8x16xf32>
    %c2_90 = arith.constant 2 : index
    %c0_91 = arith.constant 0 : index
    %c0_92 = arith.constant 0 : index
    %89 = vector.load %arg7[%c2_90, %c0_91, %c0_92] : memref<9x8x8xf32, #tpu.memory_space<vmem>>, vector<1x8x8xf32>
    %90 = vector.shape_cast %89 : vector<1x8x8xf32> to vector<8x8xf32>
    %cst_93 = arith.constant dense<0.000000e+00> : vector<8x16xf32>
    %91 = tpu.matmul %90, %88, %cst_93 {dimension_numbers = #tpu.dot_dimension_numbers<[1], [0], [0], [1], [0, 0, 1, 1], [], []>} : vector<8x8xf32>, vector<8x16xf32>, vector<8x16xf32> -> vector<8x16xf32>
    %92 = arith.addf %85, %91 : vector<8x16xf32>
    %c3_94 = arith.constant 3 : index
    %c0_95 = arith.constant 0 : index
    %c0_96 = arith.constant 0 : index
    %93 = vector.load %arg3[%c3_94, %c0_95, %c0_96] : memref<9x64x16xf32, #tpu.memory_space<vmem>>, vector<1x64x16xf32>
    %94 = vector.shape_cast %93 : vector<1x64x16xf32> to vector<64x16xf32>
    %cst_97 = arith.constant dense<0.000000e+00> : vector<8x16xf32>
    %95 = tpu.matmul %70, %94, %cst_97 {dimension_numbers = #tpu.dot_dimension_numbers<[1], [0], [0], [1], [0, 0, 1, 1], [], []>} : vector<8x64xf32>, vector<64x16xf32>, vector<8x16xf32> -> vector<8x16xf32>
    %c3_98 = arith.constant 3 : index
    %c0_99 = arith.constant 0 : index
    %c0_100 = arith.constant 0 : index
    %96 = vector.load %arg7[%c3_98, %c0_99, %c0_100] : memref<9x8x8xf32, #tpu.memory_space<vmem>>, vector<1x8x8xf32>
    %97 = vector.shape_cast %96 : vector<1x8x8xf32> to vector<8x8xf32>
    %cst_101 = arith.constant dense<0.000000e+00> : vector<8x16xf32>
    %98 = tpu.matmul %97, %95, %cst_101 {dimension_numbers = #tpu.dot_dimension_numbers<[1], [0], [0], [1], [0, 0, 1, 1], [], []>} : vector<8x8xf32>, vector<8x16xf32>, vector<8x16xf32> -> vector<8x16xf32>
    %99 = arith.addf %92, %98 : vector<8x16xf32>
    %c4_102 = arith.constant 4 : index
    %c0_103 = arith.constant 0 : index
    %c0_104 = arith.constant 0 : index
    %100 = vector.load %arg3[%c4_102, %c0_103, %c0_104] : memref<9x64x16xf32, #tpu.memory_space<vmem>>, vector<1x64x16xf32>
    %101 = vector.shape_cast %100 : vector<1x64x16xf32> to vector<64x16xf32>
    %cst_105 = arith.constant dense<0.000000e+00> : vector<8x16xf32>
    %102 = tpu.matmul %70, %101, %cst_105 {dimension_numbers = #tpu.dot_dimension_numbers<[1], [0], [0], [1], [0, 0, 1, 1], [], []>} : vector<8x64xf32>, vector<64x16xf32>, vector<8x16xf32> -> vector<8x16xf32>
    %c4_106 = arith.constant 4 : index
    %c0_107 = arith.constant 0 : index
    %c0_108 = arith.constant 0 : index
    %103 = vector.load %arg7[%c4_106, %c0_107, %c0_108] : memref<9x8x8xf32, #tpu.memory_space<vmem>>, vector<1x8x8xf32>
    %104 = vector.shape_cast %103 : vector<1x8x8xf32> to vector<8x8xf32>
    %cst_109 = arith.constant dense<0.000000e+00> : vector<8x16xf32>
    %105 = tpu.matmul %104, %102, %cst_109 {dimension_numbers = #tpu.dot_dimension_numbers<[1], [0], [0], [1], [0, 0, 1, 1], [], []>} : vector<8x8xf32>, vector<8x16xf32>, vector<8x16xf32> -> vector<8x16xf32>
    %106 = arith.addf %99, %105 : vector<8x16xf32>
    %c5_110 = arith.constant 5 : index
    %c0_111 = arith.constant 0 : index
    %c0_112 = arith.constant 0 : index
    %107 = vector.load %arg3[%c5_110, %c0_111, %c0_112] : memref<9x64x16xf32, #tpu.memory_space<vmem>>, vector<1x64x16xf32>
    %108 = vector.shape_cast %107 : vector<1x64x16xf32> to vector<64x16xf32>
    %cst_113 = arith.constant dense<0.000000e+00> : vector<8x16xf32>
    %109 = tpu.matmul %70, %108, %cst_113 {dimension_numbers = #tpu.dot_dimension_numbers<[1], [0], [0], [1], [0, 0, 1, 1], [], []>} : vector<8x64xf32>, vector<64x16xf32>, vector<8x16xf32> -> vector<8x16xf32>
    %c5_114 = arith.constant 5 : index
    %c0_115 = arith.constant 0 : index
    %c0_116 = arith.constant 0 : index
    %110 = vector.load %arg7[%c5_114, %c0_115, %c0_116] : memref<9x8x8xf32, #tpu.memory_space<vmem>>, vector<1x8x8xf32>
    %111 = vector.shape_cast %110 : vector<1x8x8xf32> to vector<8x8xf32>
    %cst_117 = arith.constant dense<0.000000e+00> : vector<8x16xf32>
    %112 = tpu.matmul %111, %109, %cst_117 {dimension_numbers = #tpu.dot_dimension_numbers<[1], [0], [0], [1], [0, 0, 1, 1], [], []>} : vector<8x8xf32>, vector<8x16xf32>, vector<8x16xf32> -> vector<8x16xf32>
    %113 = arith.addf %106, %112 : vector<8x16xf32>
    %c6_118 = arith.constant 6 : index
    %c0_119 = arith.constant 0 : index
    %c0_120 = arith.constant 0 : index
    %114 = vector.load %arg3[%c6_118, %c0_119, %c0_120] : memref<9x64x16xf32, #tpu.memory_space<vmem>>, vector<1x64x16xf32>
    %115 = vector.shape_cast %114 : vector<1x64x16xf32> to vector<64x16xf32>
    %cst_121 = arith.constant dense<0.000000e+00> : vector<8x16xf32>
    %116 = tpu.matmul %70, %115, %cst_121 {dimension_numbers = #tpu.dot_dimension_numbers<[1], [0], [0], [1], [0, 0, 1, 1], [], []>} : vector<8x64xf32>, vector<64x16xf32>, vector<8x16xf32> -> vector<8x16xf32>
    %c6_122 = arith.constant 6 : index
    %c0_123 = arith.constant 0 : index
    %c0_124 = arith.constant 0 : index
    %117 = vector.load %arg7[%c6_122, %c0_123, %c0_124] : memref<9x8x8xf32, #tpu.memory_space<vmem>>, vector<1x8x8xf32>
    %118 = vector.shape_cast %117 : vector<1x8x8xf32> to vector<8x8xf32>
    %cst_125 = arith.constant dense<0.000000e+00> : vector<8x16xf32>
    %119 = tpu.matmul %118, %116, %cst_125 {dimension_numbers = #tpu.dot_dimension_numbers<[1], [0], [0], [1], [0, 0, 1, 1], [], []>} : vector<8x8xf32>, vector<8x16xf32>, vector<8x16xf32> -> vector<8x16xf32>
    %120 = arith.addf %113, %119 : vector<8x16xf32>
    %c7_126 = arith.constant 7 : index
    %c0_127 = arith.constant 0 : index
    %c0_128 = arith.constant 0 : index
    %121 = vector.load %arg3[%c7_126, %c0_127, %c0_128] : memref<9x64x16xf32, #tpu.memory_space<vmem>>, vector<1x64x16xf32>
    %122 = vector.shape_cast %121 : vector<1x64x16xf32> to vector<64x16xf32>
    %cst_129 = arith.constant dense<0.000000e+00> : vector<8x16xf32>
    %123 = tpu.matmul %70, %122, %cst_129 {dimension_numbers = #tpu.dot_dimension_numbers<[1], [0], [0], [1], [0, 0, 1, 1], [], []>} : vector<8x64xf32>, vector<64x16xf32>, vector<8x16xf32> -> vector<8x16xf32>
    %c7_130 = arith.constant 7 : index
    %c0_131 = arith.constant 0 : index
    %c0_132 = arith.constant 0 : index
    %124 = vector.load %arg7[%c7_130, %c0_131, %c0_132] : memref<9x8x8xf32, #tpu.memory_space<vmem>>, vector<1x8x8xf32>
    %125 = vector.shape_cast %124 : vector<1x8x8xf32> to vector<8x8xf32>
    %cst_133 = arith.constant dense<0.000000e+00> : vector<8x16xf32>
    %126 = tpu.matmul %125, %123, %cst_133 {dimension_numbers = #tpu.dot_dimension_numbers<[1], [0], [0], [1], [0, 0, 1, 1], [], []>} : vector<8x8xf32>, vector<8x16xf32>, vector<8x16xf32> -> vector<8x16xf32>
    %127 = arith.addf %120, %126 : vector<8x16xf32>
    %c8_134 = arith.constant 8 : index
    %c0_135 = arith.constant 0 : index
    %c0_136 = arith.constant 0 : index
    %128 = vector.load %arg3[%c8_134, %c0_135, %c0_136] : memref<9x64x16xf32, #tpu.memory_space<vmem>>, vector<1x64x16xf32>
    %129 = vector.shape_cast %128 : vector<1x64x16xf32> to vector<64x16xf32>
    %cst_137 = arith.constant dense<0.000000e+00> : vector<8x16xf32>
    %130 = tpu.matmul %70, %129, %cst_137 {dimension_numbers = #tpu.dot_dimension_numbers<[1], [0], [0], [1], [0, 0, 1, 1], [], []>} : vector<8x64xf32>, vector<64x16xf32>, vector<8x16xf32> -> vector<8x16xf32>
    %c8_138 = arith.constant 8 : index
    %c0_139 = arith.constant 0 : index
    %c0_140 = arith.constant 0 : index
    %131 = vector.load %arg7[%c8_138, %c0_139, %c0_140] : memref<9x8x8xf32, #tpu.memory_space<vmem>>, vector<1x8x8xf32>
    %132 = vector.shape_cast %131 : vector<1x8x8xf32> to vector<8x8xf32>
    %cst_141 = arith.constant dense<0.000000e+00> : vector<8x16xf32>
    %133 = tpu.matmul %132, %130, %cst_141 {dimension_numbers = #tpu.dot_dimension_numbers<[1], [0], [0], [1], [0, 0, 1, 1], [], []>} : vector<8x8xf32>, vector<8x16xf32>, vector<8x16xf32> -> vector<8x16xf32>
    %134 = arith.addf %127, %133 : vector<8x16xf32>
    %c0_142 = arith.constant 0 : index
    %c0_143 = arith.constant 0 : index
    %135 = vector.load %arg8[%c0_142, %c0_143] : memref<8x1xf32, #tpu.memory_space<vmem>>, vector<8x1xf32>
    %136 = vector.broadcast %135 : vector<8x1xf32> to vector<8x16xf32>
    %137 = arith.addf %134, %136 : vector<8x16xf32>
    %cst_144 = arith.constant 0.000000e+00 : f32
    %138 = vector.broadcast %cst_144 : f32 to vector<8x16xf32>
    %139 = arith.maximumf %137, %138 : vector<8x16xf32>
    %c0_145 = arith.constant 0 : index
    %c0_146 = arith.constant 0 : index
    %c0_147 = arith.constant 0 : index
    %140 = vector.load %arg15[%c0_145, %c0_146, %c0_147] : memref<1x8x16xf32, #tpu.memory_space<vmem>>, vector<1x8x16xf32>
    %141 = vector.shape_cast %140 : vector<1x8x16xf32> to vector<8x16xf32>
    %142 = vector.shape_cast %139 : vector<8x16xf32> to vector<1x8x16xf32>
    tpu.vector_store %arg15[%c0_145, %c0_146, %c0_147], %142 {strides = array<i32>} : memref<1x8x16xf32, #tpu.memory_space<vmem>>, vector<1x8x16xf32>,
    %c0_148 = arith.constant 0 : index
    %c0_149 = arith.constant 0 : index
    %143 = vector.load %arg9[%c0_148, %c0_149] : memref<3x8xf32, #tpu.memory_space<vmem>>, vector<3x8xf32>
    %c0_150 = arith.constant 0 : index
    %c0_151 = arith.constant 0 : index
    %144 = vector.load %arg10[%c0_150, %c0_151] : memref<3x1xf32, #tpu.memory_space<vmem>>, vector<3x1xf32>
    %cst_152 = arith.constant dense<0.000000e+00> : vector<3x16xf32>
    %145 = tpu.matmul %143, %139, %cst_152 {dimension_numbers = #tpu.dot_dimension_numbers<[1], [0], [0], [1], [0, 0, 1, 1], [], []>} : vector<3x8xf32>, vector<8x16xf32>, vector<3x16xf32> -> vector<3x16xf32>
    %146 = vector.broadcast %144 : vector<3x1xf32> to vector<3x16xf32>
    %147 = arith.addf %145, %146 : vector<3x16xf32>
    %c0_153 = arith.constant 0 : index
    %c0_154 = arith.constant 0 : index
    %148 = vector.load %arg4[%c0_153, %c0_154] : memref<16x256xf32, #tpu.memory_space<vmem>>, vector<16x256xf32>
    %cst_155 = arith.constant dense<0.000000e+00> : vector<3x256xf32>
    %149 = tpu.matmul %147, %148, %cst_155 {dimension_numbers = #tpu.dot_dimension_numbers<[1], [0], [0], [1], [0, 0, 1, 1], [], []>} : vector<3x16xf32>, vector<16x256xf32>, vector<3x256xf32> -> vector<3x256xf32>
    %150 = arith.mulf %149, %149 : vector<3x256xf32>
    %cst_156 = arith.constant dense<0.000000e+00> : vector<256xf32>
    %151 = vector.multi_reduction <add>, %150, %cst_156 [0] : vector<3x256xf32> to vector<256xf32>
    %152 = vector.shape_cast %151 : vector<256xf32> to vector<1x256xf32>
    %cst_157 = arith.constant 1.000000e-24 : f32
    %153 = vector.broadcast %cst_157 : f32 to vector<1x256xf32>
    %154 = arith.maximumf %152, %153 : vector<1x256xf32>
    %155 = math.rsqrt %154 : vector<1x256xf32>
    %156 = vector.broadcast %155 : vector<1x256xf32> to vector<3x256xf32>
    %157 = arith.mulf %149, %156 : vector<3x256xf32>
    %c0_158 = arith.constant 0 : index
    %c0_159 = arith.constant 0 : index
    %c0_160 = arith.constant 0 : index
    %158 = vector.load %arg13[%c0_158, %c0_159, %c0_160] : memref<1x3x256xf32, #tpu.memory_space<vmem>>, vector<1x3x256xf32>
    %159 = vector.shape_cast %158 : vector<1x3x256xf32> to vector<3x256xf32>
    %160 = vector.shape_cast %157 : vector<3x256xf32> to vector<1x3x256xf32>
    tpu.vector_store %arg13[%c0_158, %c0_159, %c0_160], %160 {strides = array<i32>} : memref<1x3x256xf32, #tpu.memory_space<vmem>>, vector<1x3x256xf32>,
    %c0_161 = arith.constant 0 : index
    %c0_162 = arith.constant 0 : index
    %161 = vector.load %arg11[%c0_161, %c0_162] : memref<1x8xf32, #tpu.memory_space<vmem>>, vector<1x8xf32>
    %c0_163 = arith.constant 0 : index
    %c0_164 = arith.constant 0 : index
    %162 = vector.load %arg12[%c0_163, %c0_164] : memref<1x1xf32, #tpu.memory_space<vmem>>, vector<1x1xf32>
    %cst_165 = arith.constant dense<0.000000e+00> : vector<1x16xf32>
    %163 = tpu.matmul %161, %139, %cst_165 {dimension_numbers = #tpu.dot_dimension_numbers<[1], [0], [0], [1], [0, 0, 1, 1], [], []>} : vector<1x8xf32>, vector<8x16xf32>, vector<1x16xf32> -> vector<1x16xf32>
    %164 = vector.broadcast %162 : vector<1x1xf32> to vector<1x16xf32>
    %165 = arith.addf %163, %164 : vector<1x16xf32>
    %c0_166 = arith.constant 0 : index
    %c0_167 = arith.constant 0 : index
    %166 = vector.load %arg4[%c0_166, %c0_167] : memref<16x256xf32, #tpu.memory_space<vmem>>, vector<16x256xf32>
    %cst_168 = arith.constant dense<0.000000e+00> : vector<1x256xf32>
    %167 = tpu.matmul %165, %166, %cst_168 {dimension_numbers = #tpu.dot_dimension_numbers<[1], [0], [0], [1], [0, 0, 1, 1], [], []>} : vector<1x16xf32>, vector<16x256xf32>, vector<1x256xf32> -> vector<1x256xf32>
    %c0_169 = arith.constant 0 : index
    %c0_170 = arith.constant 0 : index
    %c0_171 = arith.constant 0 : index
    %168 = vector.load %arg14[%c0_169, %c0_170, %c0_171] : memref<1x1x256xf32, #tpu.memory_space<vmem>>, vector<1x1x256xf32>
    %169 = vector.shape_cast %168 : vector<1x1x256xf32> to vector<1x256xf32>
    %170 = vector.shape_cast %167 : vector<1x256xf32> to vector<1x1x256xf32>
    tpu.vector_store %arg14[%c0_169, %c0_170, %c0_171], %170 {strides = array<i32>} : memref<1x1x256xf32, #tpu.memory_space<vmem>>, vector<1x1x256xf32>,
    return
  }
  func.func @transform_0(%arg0: i32) -> (i32, i32, i32) {
    %c0_i32 = arith.constant 0 : i32
    %c0_i32_0 = arith.constant 0 : i32
    %c0_i32_1 = arith.constant 0 : i32
    return %arg0, %c0_i32, %c0_i32_0 : i32, i32, i32
  }
  func.func @transform_1(%arg0: i32) -> (i32, i32, i32) {
    %c0_i32 = arith.constant 0 : i32
    %c0_i32_0 = arith.constant 0 : i32
    %c0_i32_1 = arith.constant 0 : i32
    %c0_i32_2 = arith.constant 0 : i32
    return %c0_i32, %c0_i32_0, %c0_i32_1 : i32, i32, i32
  }
  func.func @transform_2(%arg0: i32) -> (i32, i32, i32) {
    %c0_i32 = arith.constant 0 : i32
    %c0_i32_0 = arith.constant 0 : i32
    %c0_i32_1 = arith.constant 0 : i32
    %c0_i32_2 = arith.constant 0 : i32
    return %c0_i32, %c0_i32_0, %c0_i32_1 : i32, i32, i32
  }
  func.func @transform_3(%arg0: i32) -> (i32, i32) {
    %c0_i32 = arith.constant 0 : i32
    %c0_i32_0 = arith.constant 0 : i32
    %c0_i32_1 = arith.constant 0 : i32
    return %c0_i32, %c0_i32_0 : i32, i32
  }
  func.func @transform_4(%arg0: i32) -> (i32, i32, i32) {
    %c0_i32 = arith.constant 0 : i32
    %c0_i32_0 = arith.constant 0 : i32
    %c0_i32_1 = arith.constant 0 : i32
    %c0_i32_2 = arith.constant 0 : i32
    return %c0_i32, %c0_i32_0, %c0_i32_1 : i32, i32, i32
  }
  func.func @transform_5(%arg0: i32) -> (i32, i32) {
    %c0_i32 = arith.constant 0 : i32
    %c0_i32_0 = arith.constant 0 : i32
    %c0_i32_1 = arith.constant 0 : i32
    return %c0_i32, %c0_i32_0 : i32, i32
  }
  func.func @transform_6(%arg0: i32) -> (i32, i32, i32) {
    %c0_i32 = arith.constant 0 : i32
    %c0_i32_0 = arith.constant 0 : i32
    %c0_i32_1 = arith.constant 0 : i32
    %c0_i32_2 = arith.constant 0 : i32
    return %c0_i32, %c0_i32_0, %c0_i32_1 : i32, i32, i32
  }
  func.func @transform_7(%arg0: i32) -> (i32, i32) {
    %c0_i32 = arith.constant 0 : i32
    %c0_i32_0 = arith.constant 0 : i32
    %c0_i32_1 = arith.constant 0 : i32
    return %c0_i32, %c0_i32_0 : i32, i32
  }
  func.func @transform_8(%arg0: i32) -> (i32, i32) {
    %c0_i32 = arith.constant 0 : i32
    %c0_i32_0 = arith.constant 0 : i32
    %c0_i32_1 = arith.constant 0 : i32
    return %c0_i32, %c0_i32_0 : i32, i32
  }
  func.func @transform_9(%arg0: i32) -> (i32, i32) {
    %c0_i32 = arith.constant 0 : i32
    %c0_i32_0 = arith.constant 0 : i32
    %c0_i32_1 = arith.constant 0 : i32
    return %c0_i32, %c0_i32_0 : i32, i32
  }
  func.func @transform_10(%arg0: i32) -> (i32, i32) {
    %c0_i32 = arith.constant 0 : i32
    %c0_i32_0 = arith.constant 0 : i32
    %c0_i32_1 = arith.constant 0 : i32
    return %c0_i32, %c0_i32_0 : i32, i32
  }
  func.func @transform_11(%arg0: i32) -> (i32, i32) {
    %c0_i32 = arith.constant 0 : i32
    %c0_i32_0 = arith.constant 0 : i32
    %c0_i32_1 = arith.constant 0 : i32
    return %c0_i32, %c0_i32_0 : i32, i32
  }
  func.func @transform_12(%arg0: i32) -> (i32, i32, i32) {
    %c0_i32 = arith.constant 0 : i32
    %c0_i32_0 = arith.constant 0 : i32
    %c0_i32_1 = arith.constant 0 : i32
    return %arg0, %c0_i32, %c0_i32_0 : i32, i32, i32
  }
  func.func @transform_13(%arg0: i32) -> (i32, i32, i32) {
    %c0_i32 = arith.constant 0 : i32
    %c0_i32_0 = arith.constant 0 : i32
    %c0_i32_1 = arith.constant 0 : i32
    return %arg0, %c0_i32, %c0_i32_0 : i32, i32, i32
  }
  func.func @transform_14(%arg0: i32) -> (i32, i32, i32) {
    %c0_i32 = arith.constant 0 : i32
    %c0_i32_0 = arith.constant 0 : i32
    %c0_i32_1 = arith.constant 0 : i32
    return %arg0, %c0_i32, %c0_i32_0 : i32, i32, i32
  }
}

</mosaic_0001>

<llo_original>
// kernel: tpu_custom_call.1
$region0: #{tpu_custom_call.1}
  #allocation0 [shape = 'u32[]', space=smem, size = 0x4, offset = 0x4, fixed_abs, tag = 'smem constant byte address 0x4 - core index']
  #allocation1 [shape = 'u32[72,128]{1,0:T(1,128)}', space=vmem, size = 0x9000, scoped, tag = 'internal scratch']
  #allocation2 [shape = 'f32[1,1]{1,0:T(1,128)S(1)}', space=vmem, size = 0x200, scoped, tag = 'scoped memory for tpu_custom_call.1']
  %s0 = inlined_call_operand.vmem [shape: f32[2,3,256], index: 0, kind: input, shape index: {}]
  %s1 = inlined_call_operand.vmem [shape: f32[9,256,64], index: 1, kind: input, shape index: {}]
  %s2 = inlined_call_operand.vmem [shape: f32[9,64,16], index: 2, kind: input, shape index: {}]
  %s3 = inlined_call_operand.vmem [shape: f32[16,256], index: 3, kind: input, shape index: {}]
  %s4 = inlined_call_operand.vmem [shape: f32[9,8,3], index: 4, kind: input, shape index: {}]
  %s5 = inlined_call_operand.vmem [shape: f32[8,1], index: 5, kind: input, shape index: {}]
  %s6 = inlined_call_operand.vmem [shape: f32[9,8,8], index: 6, kind: input, shape index: {}]
  %s7 = inlined_call_operand.vmem [shape: f32[8,1], index: 7, kind: input, shape index: {}]
  %s8 = inlined_call_operand.vmem [shape: f32[3,8], index: 8, kind: input, shape index: {}]
  %s9 = inlined_call_operand.vmem [shape: f32[3,1], index: 9, kind: input, shape index: {}]
  %s10 = inlined_call_operand.vmem [shape: f32[1,8], index: 10, kind: input, shape index: {}]
  %s11 = inlined_call_operand.<no memory space> [shape: f32[1,1], index: 11, kind: input, shape index: {}]
  %s12 = inlined_call_operand.vmem [shape: f32[2,3,256], index: 12, kind: output, shape index: {0}]
  %s13 = inlined_call_operand.hbm [shape: f32[2,1,256], index: 13, kind: output, shape index: {1}]
  %s14 = inlined_call_operand.hbm [shape: f32[2,8,16], index: 14, kind: output, shape index: {2}]
  %15 = xla_tuple %s12, %s13, %s14
  %s16 = sld [smem:[#allocation0]]
  $region97: #{tpu_custom_call.1} parent=0
    _
  %s18 = ssub.s32 1, %s16
  %s19 = scalar_select 0, %s18, %s16
  %v20 = vstv %s11
  %21 = vst [vmem:[#allocation2] sm:$0x1] %v20
  $region1: #{tpu_custom_call.1} parent=0
    #allocation3 [shape = 'u8[2048]{0}', space=vmem, size = 0x800, scoped, tag = 'output window, operand 1']
    #allocation4 [shape = 's32[2]{0}', space=sflag, size = 0x8, scoped, tag = 'scoped memory for tpu_custom_call.1']
    #allocation5 [shape = 'u8[8192]{0}', space=vmem, size = 0x2000, scoped, tag = 'output window, operand 2']
    #allocation6 [shape = 's32[2]{0}', space=sflag, size = 0x8, scoped, tag = 'scoped memory for tpu_custom_call.1']
    %22 = vsyncpa [#allocation4], 0
    %s23 = scalar_lea.sflag [#allocation4], 1
    %24 = vsyncpa %s23, 0
    %25 = vsyncpa [#allocation6], 0
    %s26 = scalar_lea.sflag [#allocation6], 1
    %27 = vsyncpa %s26, 0
    loop: start=0, step=1, limit=4
    $region2: #{tpu_custom_call.1} parent=1 // loop_pre_header
      _
    $region3: #{tpu_custom_call.1} parent=1 // loop_header
      %s29 = sphi 0, %s33
      %p30 = scmp.ge.s32.totalorder %s29, 4
      %s39 = sphi 0, %s41
      %s42 = sphi 0, %s39
      %s43 = sphi 0, %s42
      %s59 = sphi 0, %s43
      %s63 = sphi 0, %s63
      %s65 = sphi 0, %s63
      %s66 = sphi 0, %s65
      %s80 = sphi 0, %s66
      %s84 = sphi 0, %s84
      %s86 = sphi 0, %s84
      %s87 = sphi 0, %s86
      %s101 = sphi 0, %s87
      %s105 = sphi 0, %s105
      %s107 = sphi 0, %s105
      %s108 = sphi 0, %s107
      %s122 = sphi 0, %s108
      %s126 = sphi 0, %s126
      %s128 = sphi 0, %s126
      %s129 = sphi 0, %s128
      %s143 = sphi 0, %s129
      %s147 = sphi 0, %s147
      %s149 = sphi 0, %s147
      %s150 = sphi 0, %s149
      %s164 = sphi 0, %s150
      %s168 = sphi 0, %s168
      %s170 = sphi 0, %s168
      %s171 = sphi 0, %s170
      %s185 = sphi 0, %s171
      %s189 = sphi 0, %s189
      %s191 = sphi 0, %s189
      %s192 = sphi 0, %s191
      %s206 = sphi 0, %s192
      %s210 = sphi 0, %s210
      %s212 = sphi 0, %s210
      %s213 = sphi 0, %s212
      %s227 = sphi 0, %s213
      %s231 = sphi 0, %s231
      %s233 = sphi 0, %s231
      %s234 = sphi 0, %s233
      %s248 = sphi 0, %s234
      %s252 = sphi 0, %s252
      %s254 = sphi 0, %s252
      %s255 = sphi 0, %s254
      %s269 = sphi 0, %s255
      %s273 = sphi 0, %s273
      %s275 = sphi 0, %s273
      %s276 = sphi 0, %s275
      %s290 = sphi 0, %s276
      %s296 = sphi 0, %s298
      %s299 = sphi 0, %s296
      %s300 = sphi 0, %s299
      %s316 = sphi 0, %s300
      %s322 = sphi 0, %s324
      %s325 = sphi 0, %s322
      %s326 = sphi 0, %s325
      %s342 = sphi 0, %s326
      %s348 = sphi 0, %s350
      %s351 = sphi 0, %s348
      %s352 = sphi 0, %s351
      %s368 = sphi 0, %s352
    $region4: #{tpu_custom_call.1} parent=1 // loop_header_branch
      %32 = sbr.rel (%p30) target = $region8
    $region5: #{tpu_custom_call.1} parent=1 // loop_body
      %s34 = ssub.s32 %s29, 1
      %s35 = ssub.s32 %s29, 2
      %s36 = sadd.s32 %s29, 1
      %s37 = ssub.s32 %s29, %s36
      %p38 = scmp.eq.s32.totalorder %s37, 0
      %s40 = sadd.s32 %s39, 1
      %s41 = scalar_select %p38, %s39, %s40
      %p44 = pneg %p38
      %p45 = scmp.eq.s32.totalorder %s29, 1
      %p46 = por %p44, %p45
      %p47 = scmp.ne.s32.totalorder %s39, %s42
      %p48 = scmp.eq.s32.totalorder %s29, 0
      %p49 = por %p47, %p48
      %p50 = scmp.ne.s32.totalorder %s39, %s42
      %p51 = scmp.eq.s32.totalorder %s34, 1
      %p52 = por %p50, %p51
      %p53 = scmp.ne.s32.totalorder %s42, %s43
      %p54 = scmp.eq.s32.totalorder %s34, 0
      %p55 = por %p53, %p54
      %p56 = scmp.ne.s32.totalorder %s42, %s43
      %p57 = scmp.eq.s32.totalorder %s35, 1
      %p58 = por %p56, %p57
      %p60 = scmp.ne.s32.totalorder %s43, %s59
      %p61 = scmp.eq.s32.totalorder %s35, 0
      %p62 = por %p60, %p61
      %s64 = sadd.s32 %s63, 1
      %p67 = scmp.eq.s32.totalorder %s29, 1
      %p68 = scmp.ne.s32.totalorder %s63, %s65
      %p69 = scmp.eq.s32.totalorder %s29, 0
      %p70 = por %p68, %p69
      %p71 = scmp.ne.s32.totalorder %s63, %s65
      %p72 = scmp.eq.s32.totalorder %s34, 1
      %p73 = por %p71, %p72
      %p74 = scmp.ne.s32.totalorder %s65, %s66
      %p75 = scmp.eq.s32.totalorder %s34, 0
      %p76 = por %p74, %p75
      %p77 = scmp.ne.s32.totalorder %s65, %s66
      %p78 = scmp.eq.s32.totalorder %s35, 1
      %p79 = por %p77, %p78
      %p81 = scmp.ne.s32.totalorder %s66, %s80
      %p82 = scmp.eq.s32.totalorder %s35, 0
      %p83 = por %p81, %p82
      %s85 = sadd.s32 %s84, 1
      %p88 = scmp.eq.s32.totalorder %s29, 1
      %p89 = scmp.ne.s32.totalorder %s84, %s86
      %p90 = scmp.eq.s32.totalorder %s29, 0
      %p91 = por %p89, %p90
      %p92 = scmp.ne.s32.totalorder %s84, %s86
      %p93 = scmp.eq.s32.totalorder %s34, 1
      %p94 = por %p92, %p93
      %p95 = scmp.ne.s32.totalorder %s86, %s87
      %p96 = scmp.eq.s32.totalorder %s34, 0
      %p97 = por %p95, %p96
      %p98 = scmp.ne.s32.totalorder %s86, %s87
      %p99 = scmp.eq.s32.totalorder %s35, 1
      %p100 = por %p98, %p99
      %p102 = scmp.ne.s32.totalorder %s87, %s101
      %p103 = scmp.eq.s32.totalorder %s35, 0
      %p104 = por %p102, %p103
      %s106 = sadd.s32 %s105, 1
      %p109 = scmp.eq.s32.totalorder %s29, 1
      %p110 = scmp.ne.s32.totalorder %s105, %s107
      %p111 = scmp.eq.s32.totalorder %s29, 0
      %p112 = por %p110, %p111
      %p113 = scmp.ne.s32.totalorder %s105, %s107
      %p114 = scmp.eq.s32.totalorder %s34, 1
      %p115 = por %p113, %p114
      %p116 = scmp.ne.s32.totalorder %s107, %s108
      %p117 = scmp.eq.s32.totalorder %s34, 0
      %p118 = por %p116, %p117
      %p119 = scmp.ne.s32.totalorder %s107, %s108
      %p120 = scmp.eq.s32.totalorder %s35, 1
      %p121 = por %p119, %p120
      %p123 = scmp.ne.s32.totalorder %s108, %s122
      %p124 = scmp.eq.s32.totalorder %s35, 0
      %p125 = por %p123, %p124
      %s127 = sadd.s32 %s126, 1
      %p130 = scmp.eq.s32.totalorder %s29, 1
      %p131 = scmp.ne.s32.totalorder %s126, %s128
      %p132 = scmp.eq.s32.totalorder %s29, 0
      %p133 = por %p131, %p132
      %p134 = scmp.ne.s32.totalorder %s126, %s128
      %p135 = scmp.eq.s32.totalorder %s34, 1
      %p136 = por %p134, %p135
      %p137 = scmp.ne.s32.totalorder %s128, %s129
      %p138 = scmp.eq.s32.totalorder %s34, 0
      %p139 = por %p137, %p138
      %p140 = scmp.ne.s32.totalorder %s128, %s129
      %p141 = scmp.eq.s32.totalorder %s35, 1
      %p142 = por %p140, %p141
      %p144 = scmp.ne.s32.totalorder %s129, %s143
      %p145 = scmp.eq.s32.totalorder %s35, 0
      %p146 = por %p144, %p145
      %s148 = sadd.s32 %s147, 1
      %p151 = scmp.eq.s32.totalorder %s29, 1
      %p152 = scmp.ne.s32.totalorder %s147, %s149
      %p153 = scmp.eq.s32.totalorder %s29, 0
      %p154 = por %p152, %p153
      %p155 = scmp.ne.s32.totalorder %s147, %s149
      %p156 = scmp.eq.s32.totalorder %s34, 1
      %p157 = por %p155, %p156
      %p158 = scmp.ne.s32.totalorder %s149, %s150
      %p159 = scmp.eq.s32.totalorder %s34, 0
      %p160 = por %p158, %p159
      %p161 = scmp.ne.s32.totalorder %s149, %s150
      %p162 = scmp.eq.s32.totalorder %s35, 1
      %p163 = por %p161, %p162
      %p165 = scmp.ne.s32.totalorder %s150, %s164
      %p166 = scmp.eq.s32.totalorder %s35, 0
      %p167 = por %p165, %p166
      %s169 = sadd.s32 %s168, 1
      %p172 = scmp.eq.s32.totalorder %s29, 1
      %p173 = scmp.ne.s32.totalorder %s168, %s170
      %p174 = scmp.eq.s32.totalorder %s29, 0
      %p175 = por %p173, %p174
      %p176 = scmp.ne.s32.totalorder %s168, %s170
      %p177 = scmp.eq.s32.totalorder %s34, 1
      %p178 = por %p176, %p177
      %p179 = scmp.ne.s32.totalorder %s170, %s171
      %p180 = scmp.eq.s32.totalorder %s34, 0
      %p181 = por %p179, %p180
      %p182 = scmp.ne.s32.totalorder %s170, %s171
      %p183 = scmp.eq.s32.totalorder %s35, 1
      %p184 = por %p182, %p183
      %p186 = scmp.ne.s32.totalorder %s171, %s185
      %p187 = scmp.eq.s32.totalorder %s35, 0
      %p188 = por %p186, %p187
      %s190 = sadd.s32 %s189, 1
      %p193 = scmp.eq.s32.totalorder %s29, 1
      %p194 = scmp.ne.s32.totalorder %s189, %s191
      %p195 = scmp.eq.s32.totalorder %s29, 0
      %p196 = por %p194, %p195
      %p197 = scmp.ne.s32.totalorder %s189, %s191
      %p198 = scmp.eq.s32.totalorder %s34, 1
      %p199 = por %p197, %p198
      %p200 = scmp.ne.s32.totalorder %s191, %s192
      %p201 = scmp.eq.s32.totalorder %s34, 0
      %p202 = por %p200, %p201
      %p203 = scmp.ne.s32.totalorder %s191, %s192
      %p204 = scmp.eq.s32.totalorder %s35, 1
      %p205 = por %p203, %p204
      %p207 = scmp.ne.s32.totalorder %s192, %s206
      %p208 = scmp.eq.s32.totalorder %s35, 0
      %p209 = por %p207, %p208
      %s211 = sadd.s32 %s210, 1
      %p214 = scmp.eq.s32.totalorder %s29, 1
      %p215 = scmp.ne.s32.totalorder %s210, %s212
      %p216 = scmp.eq.s32.totalorder %s29, 0
      %p217 = por %p215, %p216
      %p218 = scmp.ne.s32.totalorder %s210, %s212
      %p219 = scmp.eq.s32.totalorder %s34, 1
      %p220 = por %p218, %p219
      %p221 = scmp.ne.s32.totalorder %s212, %s213
      %p222 = scmp.eq.s32.totalorder %s34, 0
      %p223 = por %p221, %p222
      %p224 = scmp.ne.s32.totalorder %s212, %s213
      %p225 = scmp.eq.s32.totalorder %s35, 1
      %p226 = por %p224, %p225
      %p228 = scmp.ne.s32.totalorder %s213, %s227
      %p229 = scmp.eq.s32.totalorder %s35, 0
      %p230 = por %p228, %p229
      %s232 = sadd.s32 %s231, 1
      %p235 = scmp.eq.s32.totalorder %s29, 1
      %p236 = scmp.ne.s32.totalorder %s231, %s233
      %p237 = scmp.eq.s32.totalorder %s29, 0
      %p238 = por %p236, %p237
      %p239 = scmp.ne.s32.totalorder %s231, %s233
      %p240 = scmp.eq.s32.totalorder %s34, 1
      %p241 = por %p239, %p240
      %p242 = scmp.ne.s32.totalorder %s233, %s234
      %p243 = scmp.eq.s32.totalorder %s34, 0
      %p244 = por %p242, %p243
      %p245 = scmp.ne.s32.totalorder %s233, %s234
      %p246 = scmp.eq.s32.totalorder %s35, 1
      %p247 = por %p245, %p246
      %p249 = scmp.ne.s32.totalorder %s234, %s248
      %p250 = scmp.eq.s32.totalorder %s35, 0
      %p251 = por %p249, %p250
      %s253 = sadd.s32 %s252, 1
      %p256 = scmp.eq.s32.totalorder %s29, 1
      %p257 = scmp.ne.s32.totalorder %s252, %s254
      %p258 = scmp.eq.s32.totalorder %s29, 0
      %p259 = por %p257, %p258
      %p260 = scmp.ne.s32.totalorder %s252, %s254
      %p261 = scmp.eq.s32.totalorder %s34, 1
      %p262 = por %p260, %p261
      %p263 = scmp.ne.s32.totalorder %s254, %s255
      %p264 = scmp.eq.s32.totalorder %s34, 0
      %p265 = por %p263, %p264
      %p266 = scmp.ne.s32.totalorder %s254, %s255
      %p267 = scmp.eq.s32.totalorder %s35, 1
      %p268 = por %p266, %p267
      %p270 = scmp.ne.s32.totalorder %s255, %s269
      %p271 = scmp.eq.s32.totalorder %s35, 0
      %p272 = por %p270, %p271
      %s274 = sadd.s32 %s273, 1
      %p277 = scmp.eq.s32.totalorder %s29, 1
      %p278 = scmp.ne.s32.totalorder %s273, %s275
      %p279 = scmp.eq.s32.totalorder %s29, 0
      %p280 = por %p278, %p279
      %p281 = scmp.ne.s32.totalorder %s273, %s275
      %p282 = scmp.eq.s32.totalorder %s34, 1
      %p283 = por %p281, %p282
      %p284 = scmp.ne.s32.totalorder %s275, %s276
      %p285 = scmp.eq.s32.totalorder %s34, 0
      %p286 = por %p284, %p285
      %p287 = scmp.ne.s32.totalorder %s275, %s276
      %p288 = scmp.eq.s32.totalorder %s35, 1
      %p289 = por %p287, %p288
      %p291 = scmp.ne.s32.totalorder %s276, %s290
      %p292 = scmp.eq.s32.totalorder %s35, 0
      %p293 = por %p291, %p292
      %s294 = ssub.s32 %s29, %s36
      %p295 = scmp.eq.s32.totalorder %s294, 0
      %s297 = sadd.s32 %s296, 1
      %s298 = scalar_select %p295, %s296, %s297
      %p301 = pneg %p295
      %p302 = scmp.eq.s32.totalorder %s29, 1
      %p303 = por %p301, %p302
      %p304 = scmp.ne.s32.totalorder %s296, %s299
      %p305 = scmp.eq.s32.totalorder %s29, 0
      %p306 = por %p304, %p305
      %p307 = scmp.ne.s32.totalorder %s296, %s299
      %p308 = scmp.eq.s32.totalorder %s34, 1
      %p309 = por %p307, %p308
      %p310 = scmp.ne.s32.totalorder %s299, %s300
      %p311 = scmp.eq.s32.totalorder %s34, 0
      %p312 = por %p310, %p311
      %p313 = scmp.ne.s32.totalorder %s299, %s300
      %p314 = scmp.eq.s32.totalorder %s35, 1
      %p315 = por %p313, %p314
      %p317 = scmp.ne.s32.totalorder %s300, %s316
      %p318 = scmp.eq.s32.totalorder %s35, 0
      %p319 = por %p317, %p318
      %s320 = ssub.s32 %s29, %s36
      %p321 = scmp.eq.s32.totalorder %s320, 0
      %s323 = sadd.s32 %s322, 1
      %s324 = scalar_select %p321, %s322, %s323
      %p327 = pneg %p321
      %p328 = scmp.eq.s32.totalorder %s29, 1
      %p329 = por %p327, %p328
      %p330 = scmp.ne.s32.totalorder %s322, %s325
      %p331 = scmp.eq.s32.totalorder %s29, 0
      %p332 = por %p330, %p331
      %p333 = scmp.ne.s32.totalorder %s322, %s325
      %p334 = scmp.eq.s32.totalorder %s34, 1
      %p335 = por %p333, %p334
      %p336 = scmp.ne.s32.totalorder %s325, %s326
      %p337 = scmp.eq.s32.totalorder %s34, 0
      %p338 = por %p336, %p337
      %p339 = scmp.ne.s32.totalorder %s325, %s326
      %p340 = scmp.eq.s32.totalorder %s35, 1
      %p341 = por %p339, %p340
      %p343 = scmp.ne.s32.totalorder %s326, %s342
      %p344 = scmp.eq.s32.totalorder %s35, 0
      %p345 = por %p343, %p344
      %s346 = ssub.s32 %s29, %s36
      %p347 = scmp.eq.s32.totalorder %s346, 0
      %s349 = sadd.s32 %s348, 1
      %s350 = scalar_select %p347, %s348, %s349
      %p353 = pneg %p347
      %p354 = scmp.eq.s32.totalorder %s29, 1
      %p355 = por %p353, %p354
      %p356 = scmp.ne.s32.totalorder %s348, %s351
      %p357 = scmp.eq.s32.totalorder %s29, 0
      %p358 = por %p356, %p357
      %p359 = scmp.ne.s32.totalorder %s348, %s351
      %p360 = scmp.eq.s32.totalorder %s34, 1
      %p361 = por %p359, %p360
      %p362 = scmp.ne.s32.totalorder %s351, %s352
      %p363 = scmp.eq.s32.totalorder %s34, 0
      %p364 = por %p362, %p363
      %p365 = scmp.ne.s32.totalorder %s351, %s352
      %p366 = scmp.eq.s32.totalorder %s35, 1
      %p367 = por %p365, %p366
      %p369 = scmp.ne.s32.totalorder %s352, %s368
      %p370 = scmp.eq.s32.totalorder %s35, 0
      %p371 = por %p369, %p370
      %p372 = scmp.le.s32.totalorder 1, %s29
      %p373 = scmp.lt.s32.totalorder %s29, 3
      %p374 = pnand %p372, %p373
      %p375 = pneg %p374
      // Predicated region
      $region9: #{tpu_custom_call.1} parent=5 // pred_check
        _
      $region10: #{tpu_custom_call.1} parent=5 // pred_check_branch
        %377 = sbr.rel (%p374) target = $region12
      $region11: #{tpu_custom_call.1} parent=5 // pred_region
        %s378 = ssub.s32 %s29, 1
        // Predicated region
        $region13: #{tpu_custom_call.1} parent=11 // pred_check
          %p379 = pneg %p76
        $region14: #{tpu_custom_call.1} parent=11 // pred_check_branch
          %381 = sbr.rel (%p379) target = $region16
        $region15: #{tpu_custom_call.1} parent=11 // pred_region
          _
        $region16: #{tpu_custom_call.1} parent=11 // pred_fallthru
          _
        // Predicated region
        $region17: #{tpu_custom_call.1} parent=11 // pred_check
          %p382 = pneg %p97
        $region18: #{tpu_custom_call.1} parent=11 // pred_check_branch
          %384 = sbr.rel (%p382) target = $region20
        $region19: #{tpu_custom_call.1} parent=11 // pred_region
          _
        $region20: #{tpu_custom_call.1} parent=11 // pred_fallthru
          _
        // Predicated region
        $region21: #{tpu_custom_call.1} parent=11 // pred_check
          %p385 = pneg %p118
        $region22: #{tpu_custom_call.1} parent=11 // pred_check_branch
          %387 = sbr.rel (%p385) target = $region24
        $region23: #{tpu_custom_call.1} parent=11 // pred_region
          _
        $region24: #{tpu_custom_call.1} parent=11 // pred_fallthru
          _
        // Predicated region
        $region25: #{tpu_custom_call.1} parent=11 // pred_check
          %p388 = pneg %p139
        $region26: #{tpu_custom_call.1} parent=11 // pred_check_branch
          %390 = sbr.rel (%p388) target = $region28
        $region27: #{tpu_custom_call.1} parent=11 // pred_region
          _
        $region28: #{tpu_custom_call.1} parent=11 // pred_fallthru
          _
        // Predicated region
        $region29: #{tpu_custom_call.1} parent=11 // pred_check
          %p391 = pneg %p160
        $region30: #{tpu_custom_call.1} parent=11 // pred_check_branch
          %393 = sbr.rel (%p391) target = $region32
        $region31: #{tpu_custom_call.1} parent=11 // pred_region
          _
        $region32: #{tpu_custom_call.1} parent=11 // pred_fallthru
          _
        // Predicated region
        $region33: #{tpu_custom_call.1} parent=11 // pred_check
          %p394 = pneg %p181
        $region34: #{tpu_custom_call.1} parent=11 // pred_check_branch
          %396 = sbr.rel (%p394) target = $region36
        $region35: #{tpu_custom_call.1} parent=11 // pred_region
          _
        $region36: #{tpu_custom_call.1} parent=11 // pred_fallthru
          _
        // Predicated region
        $region37: #{tpu_custom_call.1} parent=11 // pred_check
          %p397 = pneg %p202
        $region38: #{tpu_custom_call.1} parent=11 // pred_check_branch
          %399 = sbr.rel (%p397) target = $region40
        $region39: #{tpu_custom_call.1} parent=11 // pred_region
          _
        $region40: #{tpu_custom_call.1} parent=11 // pred_fallthru
          _
        // Predicated region
        $region41: #{tpu_custom_call.1} parent=11 // pred_check
          %p400 = pneg %p223
        $region42: #{tpu_custom_call.1} parent=11 // pred_check_branch
          %402 = sbr.rel (%p400) target = $region44
        $region43: #{tpu_custom_call.1} parent=11 // pred_region
          _
        $region44: #{tpu_custom_call.1} parent=11 // pred_fallthru
          _
        // Predicated region
        $region45: #{tpu_custom_call.1} parent=11 // pred_check
          %p403 = pneg %p244
        $region46: #{tpu_custom_call.1} parent=11 // pred_check_branch
          %405 = sbr.rel (%p403) target = $region48
        $region47: #{tpu_custom_call.1} parent=11 // pred_region
          _
        $region48: #{tpu_custom_call.1} parent=11 // pred_fallthru
          _
        // Predicated region
        $region49: #{tpu_custom_call.1} parent=11 // pred_check
          %p406 = pneg %p265
        $region50: #{tpu_custom_call.1} parent=11 // pred_check_branch
          %408 = sbr.rel (%p406) target = $region52
        $region51: #{tpu_custom_call.1} parent=11 // pred_region
          _
        $region52: #{tpu_custom_call.1} parent=11 // pred_fallthru
          _
        // Predicated region
        $region53: #{tpu_custom_call.1} parent=11 // pred_check
          %p409 = pneg %p286
        $region54: #{tpu_custom_call.1} parent=11 // pred_check_branch
          %411 = sbr.rel (%p409) target = $region56
        $region55: #{tpu_custom_call.1} parent=11 // pred_region
          _
        $region56: #{tpu_custom_call.1} parent=11 // pred_fallthru
          _
      $region12: #{tpu_custom_call.1} parent=5 // pred_fallthru
        _
      %p412 = scmp.lt.s32.totalorder %s29, 2
      // Predicated region
      $region57: #{tpu_custom_call.1} parent=5 // pred_check
        %p413 = pneg %p412
      $region58: #{tpu_custom_call.1} parent=5 // pred_check_branch
        %415 = sbr.rel (%p413) target = $region60
      $region59: #{tpu_custom_call.1} parent=5 // pred_region
        // Predicated region
        $region61: #{tpu_custom_call.1} parent=59 // pred_check
          %p416 = pneg %p49
        $region62: #{tpu_custom_call.1} parent=59 // pred_check_branch
          %418 = sbr.rel (%p416) target = $region64
        $region63: #{tpu_custom_call.1} parent=59 // pred_region
          %p419 = scmp.lt.s32.totalorder %s29, 1
          %s420 = scalar_select %p419, %s29, 1
          %s421 = smul.addr %s420, 2
          %s422 = smul.addr %s421, 4
          %s423 = scalar_lea.vmem %s0, %s422
        $region64: #{tpu_custom_call.1} parent=59 // pred_fallthru
          _
      $region60: #{tpu_custom_call.1} parent=5 // pred_fallthru
        _
      %p424 = scmp.le.s32.totalorder 1, %s29
      %p425 = scmp.lt.s32.totalorder %s29, 3
      %p426 = pnand %p424, %p425
      %p427 = pneg %p426
      // Predicated region
      $region65: #{tpu_custom_call.1} parent=5 // pred_check
        _
      $region66: #{tpu_custom_call.1} parent=5 // pred_check_branch
        %429 = sbr.rel (%p426) target = $region68
      $region67: #{tpu_custom_call.1} parent=5 // pred_region
        %s430 = ssub.s32 %s29, 1
        %p431 = scmp.lt.s32.totalorder %s34, 1
        %s432 = scalar_select %p431, %s34, 1
        %s433 = smul.addr %s432, 2
        %s434 = smul.addr %s433, 4
        %s435 = scalar_lea.vmem %s0, %s434
        %p436 = pneg %p55
        %p437 = pneg %p52
        %p438 = pneg %p76
        %p439 = pneg %p73
        %p440 = pneg %p97
        %p441 = pneg %p94
        %p442 = pneg %p118
        %p443 = pneg %p115
        %p444 = pneg %p139
        %p445 = pneg %p136
        %p446 = pneg %p160
        %p447 = pneg %p157
        %p448 = pneg %p181
        %p449 = pneg %p178
        %p450 = pneg %p202
        %p451 = pneg %p199
        %p452 = pneg %p223
        %p453 = pneg %p220
        %p454 = pneg %p244
        %p455 = pneg %p241
        %p456 = pneg %p265
        %p457 = pneg %p262
        %p458 = pneg %p286
        %p459 = pneg %p283
        %p460 = pneg %p312
        %p461 = pneg %p309
        %p462 = scmp.lt.s32.totalorder %s34, 1
        %s463 = scalar_select %p462, %s34, 1
        %s464 = smul.addr %s463, 2
        %s465 = smul.addr %s464, 4
        %s466 = scalar_lea.vmem %s12, %s465
        %p467 = pneg %p338
        %p468 = pneg %p335
        %s469 = sand.u32 %s325, 1
        %s470 = scalar_lea.sflag [#allocation4], %s469
        %s471 = sand.u32 %s325, 1
        %s472 = smul.addr %s471, 2
        %s473 = scalar_lea.vmem [#allocation3], %s472
        %p474 = pneg %p364
        %p475 = pneg %p361
        %s476 = sand.u32 %s351, 1
        %s477 = scalar_lea.sflag [#allocation6], %s476
        %s478 = sand.u32 %s351, 1
        %s479 = smul.addr %s478, 8
        %s480 = scalar_lea.vmem [#allocation5], %s479
        %p481 = scmp.lt.s32.totalorder %s34, 1
        %s482 = scalar_select %p481, %s34, 1
        %s483 = smul.addr %s482, 2
        %s484 = smul.addr %s483, 4
        %s485 = scalar_lea.vmem %s0, %s484
        %p486 = scmp.lt.s32.totalorder %s34, 1
        %s487 = scalar_select %p486, %s34, 1
        %s488 = smul.addr %s487, 2
        %s489 = smul.addr %s488, 4
        %s490 = scalar_lea.vmem %s12, %s489
        %v491 = vld [vmem:[%s485] sm:$0x77]
        %v492 = vld [vmem:[%s1] sm:$0xff]
        %v493 = vld [vmem:[%s1 + $0x8] sm:$0xff]
        %v494 = vld [vmem:[%s1 + $0x10] sm:$0xff]
        %v495 = vld [vmem:[%s1 + $0x18] sm:$0xff]
        %v496 = vld [vmem:[%s1 + $0x20] sm:$0xff]
        %v497 = vld [vmem:[%s1 + $0x28] sm:$0xff]
        %v498 = vld [vmem:[%s1 + $0x30] sm:$0xff]
        %v499 = vld [vmem:[%s1 + $0x38] sm:$0xff]
        %v500 = vld [vmem:[%s1 + $0x40] sm:$0xff]
        %v501 = vld [vmem:[%s1 + $0x48] sm:$0xff]
        %v502 = vld [vmem:[%s1 + $0x50] sm:$0xff]
        %v503 = vld [vmem:[%s1 + $0x58] sm:$0xff]
        %v504 = vld [vmem:[%s1 + $0x60] sm:$0xff]
        %v505 = vld [vmem:[%s1 + $0x68] sm:$0xff]
        %v506 = vld [vmem:[%s1 + $0x70] sm:$0xff]
        %v507 = vld [vmem:[%s1 + $0x78] sm:$0xff]
        %v508 = vld [vmem:[%s1 + $0x80] sm:$0xff]
        %v509 = vld [vmem:[%s1 + $0x88] sm:$0xff]
        %v510 = vld [vmem:[%s1 + $0x90] sm:$0xff]
        %v511 = vld [vmem:[%s1 + $0x98] sm:$0xff]
        %v512 = vld [vmem:[%s1 + $0xa0] sm:$0xff]
        %v513 = vld [vmem:[%s1 + $0xa8] sm:$0xff]
        %v514 = vld [vmem:[%s1 + $0xb0] sm:$0xff]
        %v515 = vld [vmem:[%s1 + $0xb8] sm:$0xff]
        %v516 = vld [vmem:[%s1 + $0xc0] sm:$0xff]
        %v517 = vld [vmem:[%s1 + $0xc8] sm:$0xff]
        %v518 = vld [vmem:[%s1 + $0xd0] sm:$0xff]
        %v519 = vld [vmem:[%s1 + $0xd8] sm:$0xff]
        %v520 = vld [vmem:[%s1 + $0xe0] sm:$0xff]
        %v521 = vld [vmem:[%s1 + $0xe8] sm:$0xff]
        %v522 = vld [vmem:[%s1 + $0xf0] sm:$0xff]
        %v523 = vld [vmem:[%s1 + $0xf8] sm:$0xff]
        %525 = vst [vmem:[#allocation1] ss:$2 sm:$0xff] %v491
        %v526 = vld.sshfl [vmem:[#allocation1] sm:$0xff pattern:$0x75316420]
        %v527 = vld.sshfl [vmem:[#allocation1 + $0x8] sm:$0xff pattern:$0x75316420]
        %530 = vmatpush.msra.mxu0 %v507
        %531 = vmatpush.msra.mxu0 %v506
        %532 = vmatpush.msra.mxu0 %v505
        %533 = vmatpush.msra.mxu0 %v504
        %534 = vmatpush.msra.mxu0 %v503
        %535 = vmatpush.msra.mxu0 %v502
        %536 = vmatpush.msra.mxu0 %v501
        %537 = vmatpush.msra.mxu0 %v500
        %538 = vmatpush.msra.mxu0 %v499
        %539 = vmatpush.msra.mxu0 %v498
        %540 = vmatpush.msra.mxu0 %v497
        %541 = vmatpush.msra.mxu0 %v496
        %542 = vmatpush.msra.mxu0 %v495
        %543 = vmatpush.msra.mxu0 %v494
        %544 = vmatpush.msra.mxu0 %v493
        %545 = vmatpush.msra.mxu0 %v492
        %546 = vmatmul.f32.gmra.mxu0 %v526
        %v547 = vpop.f32.mrf.mxu0
        %v548 = vadd.f32 0.0, %v547
        %549 = vdwg.mxu0
        %550 = vmatpush.msra.mxu0 %v523
        %551 = vmatpush.msra.mxu0 %v522
        %552 = vmatpush.msra.mxu0 %v521
        %553 = vmatpush.msra.mxu0 %v520
        %554 = vmatpush.msra.mxu0 %v519
        %555 = vmatpush.msra.mxu0 %v518
        %556 = vmatpush.msra.mxu0 %v517
        %557 = vmatpush.msra.mxu0 %v516
        %558 = vmatpush.msra.mxu0 %v515
        %559 = vmatpush.msra.mxu0 %v514
        %560 = vmatpush.msra.mxu0 %v513
        %561 = vmatpush.msra.mxu0 %v512
        %562 = vmatpush.msra.mxu0 %v511
        %563 = vmatpush.msra.mxu0 %v510
        %564 = vmatpush.msra.mxu0 %v509
        %565 = vmatpush.msra.mxu0 %v508
        %566 = vmatmul.f32.gmra.mxu0 %v527
        %v567 = vpop.f32.mrf.mxu0
        %v568 = vadd.f32 %v548, %v567
        %569 = vdwg.mxu0
        %v570 = vld [vmem:[%s4] sm:$0xff]
        %s571 = scalar_lea.vmem %s1, 256
        %v572 = vld [vmem:[%s571] sm:$0xff]
        %v573 = vld [vmem:[%s571 + $0x8] sm:$0xff]
        %v574 = vld [vmem:[%s571 + $0x10] sm:$0xff]
        %v575 = vld [vmem:[%s571 + $0x18] sm:$0xff]
        %v576 = vld [vmem:[%s571 + $0x20] sm:$0xff]
        %v577 = vld [vmem:[%s571 + $0x28] sm:$0xff]
        %v578 = vld [vmem:[%s571 + $0x30] sm:$0xff]
        %v579 = vld [vmem:[%s571 + $0x38] sm:$0xff]
        %v580 = vld [vmem:[%s571 + $0x40] sm:$0xff]
        %v581 = vld [vmem:[%s571 + $0x48] sm:$0xff]
        %v582 = vld [vmem:[%s571 + $0x50] sm:$0xff]
        %v583 = vld [vmem:[%s571 + $0x58] sm:$0xff]
        %v584 = vld [vmem:[%s571 + $0x60] sm:$0xff]
        %v585 = vld [vmem:[%s571 + $0x68] sm:$0xff]
        %v586 = vld [vmem:[%s571 + $0x70] sm:$0xff]
        %v587 = vld [vmem:[%s571 + $0x78] sm:$0xff]
        %v588 = vld [vmem:[%s571 + $0x80] sm:$0xff]
        %v589 = vld [vmem:[%s571 + $0x88] sm:$0xff]
        %v590 = vld [vmem:[%s571 + $0x90] sm:$0xff]
        %v591 = vld [vmem:[%s571 + $0x98] sm:$0xff]
        %v592 = vld [vmem:[%s571 + $0xa0] sm:$0xff]
        %v593 = vld [vmem:[%s571 + $0xa8] sm:$0xff]
        %v594 = vld [vmem:[%s571 + $0xb0] sm:$0xff]
        %v595 = vld [vmem:[%s571 + $0xb8] sm:$0xff]
        %v596 = vld [vmem:[%s571 + $0xc0] sm:$0xff]
        %v597 = vld [vmem:[%s571 + $0xc8] sm:$0xff]
        %v598 = vld [vmem:[%s571 + $0xd0] sm:$0xff]
        %v599 = vld [vmem:[%s571 + $0xd8] sm:$0xff]
        %v600 = vld [vmem:[%s571 + $0xe0] sm:$0xff]
        %v601 = vld [vmem:[%s571 + $0xe8] sm:$0xff]
        %v602 = vld [vmem:[%s571 + $0xf0] sm:$0xff]
        %v603 = vld [vmem:[%s571 + $0xf8] sm:$0xff]
        %604 = vst [vmem:[#allocation1] ss:$2 sm:$0xff] %v491
        %v605 = vld.sshfl [vmem:[#allocation1] sm:$0xff pattern:$0x75316420]
        %v606 = vld.sshfl [vmem:[#allocation1 + $0x8] sm:$0xff pattern:$0x75316420]
        %609 = vmatpush.msra.mxu0 %v587
        %610 = vmatpush.msra.mxu0 %v586
        %611 = vmatpush.msra.mxu0 %v585
        %612 = vmatpush.msra.mxu0 %v584
        %613 = vmatpush.msra.mxu0 %v583
        %614 = vmatpush.msra.mxu0 %v582
        %615 = vmatpush.msra.mxu0 %v581
        %616 = vmatpush.msra.mxu0 %v580
        %617 = vmatpush.msra.mxu0 %v579
        %618 = vmatpush.msra.mxu0 %v578
        %619 = vmatpush.msra.mxu0 %v577
        %620 = vmatpush.msra.mxu0 %v576
        %621 = vmatpush.msra.mxu0 %v575
        %622 = vmatpush.msra.mxu0 %v574
        %623 = vmatpush.msra.mxu0 %v573
        %624 = vmatpush.msra.mxu0 %v572
        %625 = vmatmul.f32.gmra.mxu0 %v605
        %v626 = vpop.f32.mrf.mxu0
        %v627 = vadd.f32 0.0, %v626
        %628 = vdwg.mxu0
        %629 = vmatpush.msra.mxu0 %v603
        %630 = vmatpush.msra.mxu0 %v602
        %631 = vmatpush.msra.mxu0 %v601
        %632 = vmatpush.msra.mxu0 %v600
        %633 = vmatpush.msra.mxu0 %v599
        %634 = vmatpush.msra.mxu0 %v598
        %635 = vmatpush.msra.mxu0 %v597
        %636 = vmatpush.msra.mxu0 %v596
        %637 = vmatpush.msra.mxu0 %v595
        %638 = vmatpush.msra.mxu0 %v594
        %639 = vmatpush.msra.mxu0 %v593
        %640 = vmatpush.msra.mxu0 %v592
        %641 = vmatpush.msra.mxu0 %v591
        %642 = vmatpush.msra.mxu0 %v590
        %643 = vmatpush.msra.mxu0 %v589
        %644 = vmatpush.msra.mxu0 %v588
        %645 = vmatmul.f32.gmra.mxu0 %v606
        %v646 = vpop.f32.mrf.mxu0
        %v647 = vadd.f32 %v627, %v646
        %648 = vdwg.mxu0
        %s649 = scalar_lea.vmem %s4, 8
        %v650 = vld [vmem:[%s649] sm:$0xff]
        %vm651 = vcmask 23552
        %v653 = vsel %vm651, %v650, 0
        %vm655 = vcmask 1042432
        %v657 = vsel %vm655, %v647, 0
        %659 = vmatpush.msra.mxu0 0.0
        %660 = vmatpush.msra.mxu0 0.0
        %661 = vmatpush.msra.mxu0 0.0
        %662 = vmatpush.msra.mxu0 0.0
        %663 = vmatpush.msra.mxu0 0.0
        %664 = vmatpush.msra.mxu0 0.0
        %665 = vmatpush.msra.mxu0 0.0
        %666 = vmatpush.msra.mxu0 0.0
        %667 = vmatpush.msra.mxu0 0.0
        %668 = vmatpush.msra.mxu0 0.0
        %669 = vmatpush.msra.mxu0 0.0
        %670 = vmatpush.msra.mxu0 0.0
        %671 = vmatpush.msra.mxu0 0.0
        %672 = vmatpush.msra.mxu0 0.0
        %673 = vmatpush.msra.mxu0 0.0
        %674 = vmatpush.msra.mxu0 %v657
        %675 = vmatmul.f32.gmra.mxu0 %v653
        %v676 = vpop.f32.mrf.mxu0
        %v677 = vadd.f32 0.0, %v676
        %678 = vdwg.mxu0
        %v680 = vsel %vm651, %v570, 0
        %v683 = vsel %vm655, %v568, 0
        %685 = vmatpush.msra.mxu0 0.0
        %686 = vmatpush.msra.mxu0 0.0
        %687 = vmatpush.msra.mxu0 0.0
        %688 = vmatpush.msra.mxu0 0.0
        %689 = vmatpush.msra.mxu0 0.0
        %690 = vmatpush.msra.mxu0 0.0
        %691 = vmatpush.msra.mxu0 0.0
        %692 = vmatpush.msra.mxu0 0.0
        %693 = vmatpush.msra.mxu0 0.0
        %694 = vmatpush.msra.mxu0 0.0
        %695 = vmatpush.msra.mxu0 0.0
        %696 = vmatpush.msra.mxu0 0.0
        %697 = vmatpush.msra.mxu0 0.0
        %698 = vmatpush.msra.mxu0 0.0
        %699 = vmatpush.msra.mxu0 0.0
        %700 = vmatpush.msra.mxu0 %v683
        %701 = vmatmul.f32.gmra.mxu0 %v680
        %v702 = vpop.f32.mrf.mxu0
        %v703 = vadd.f32 %v677, %v702
        %704 = vdwg.mxu0
        %s705 = scalar_lea.vmem %s1, 512
        %v706 = vld [vmem:[%s705] sm:$0xff]
        %v707 = vld [vmem:[%s705 + $0x8] sm:$0xff]
        %v708 = vld [vmem:[%s705 + $0x10] sm:$0xff]
        %v709 = vld [vmem:[%s705 + $0x18] sm:$0xff]
        %v710 = vld [vmem:[%s705 + $0x20] sm:$0xff]
        %v711 = vld [vmem:[%s705 + $0x28] sm:$0xff]
        %v712 = vld [vmem:[%s705 + $0x30] sm:$0xff]
        %v713 = vld [vmem:[%s705 + $0x38] sm:$0xff]
        %v714 = vld [vmem:[%s705 + $0x40] sm:$0xff]
        %v715 = vld [vmem:[%s705 + $0x48] sm:$0xff]
        %v716 = vld [vmem:[%s705 + $0x50] sm:$0xff]
        %v717 = vld [vmem:[%s705 + $0x58] sm:$0xff]
        %v718 = vld [vmem:[%s705 + $0x60] sm:$0xff]
        %v719 = vld [vmem:[%s705 + $0x68] sm:$0xff]
        %v720 = vld [vmem:[%s705 + $0x70] sm:$0xff]
        %v721 = vld [vmem:[%s705 + $0x78] sm:$0xff]
        %v722 = vld [vmem:[%s705 + $0x80] sm:$0xff]
        %v723 = vld [vmem:[%s705 + $0x88] sm:$0xff]
        %v724 = vld [vmem:[%s705 + $0x90] sm:$0xff]
        %v725 = vld [vmem:[%s705 + $0x98] sm:$0xff]
        %v726 = vld [vmem:[%s705 + $0xa0] sm:$0xff]
        %v727 = vld [vmem:[%s705 + $0xa8] sm:$0xff]
        %v728 = vld [vmem:[%s705 + $0xb0] sm:$0xff]
        %v729 = vld [vmem:[%s705 + $0xb8] sm:$0xff]
        %v730 = vld [vmem:[%s705 + $0xc0] sm:$0xff]
        %v731 = vld [vmem:[%s705 + $0xc8] sm:$0xff]
        %v732 = vld [vmem:[%s705 + $0xd0] sm:$0xff]
        %v733 = vld [vmem:[%s705 + $0xd8] sm:$0xff]
        %v734 = vld [vmem:[%s705 + $0xe0] sm:$0xff]
        %v735 = vld [vmem:[%s705 + $0xe8] sm:$0xff]
        %v736 = vld [vmem:[%s705 + $0xf0] sm:$0xff]
        %v737 = vld [vmem:[%s705 + $0xf8] sm:$0xff]
        %738 = vst [vmem:[#allocation1] ss:$2 sm:$0xff] %v491
        %v739 = vld.sshfl [vmem:[#allocation1] sm:$0xff pattern:$0x75316420]
        %v740 = vld.sshfl [vmem:[#allocation1 + $0x8] sm:$0xff pattern:$0x75316420]
        %743 = vmatpush.msra.mxu0 %v721
        %744 = vmatpush.msra.mxu0 %v720
        %745 = vmatpush.msra.mxu0 %v719
        %746 = vmatpush.msra.mxu0 %v718
        %747 = vmatpush.msra.mxu0 %v717
        %748 = vmatpush.msra.mxu0 %v716
        %749 = vmatpush.msra.mxu0 %v715
        %750 = vmatpush.msra.mxu0 %v714
        %751 = vmatpush.msra.mxu0 %v713
        %752 = vmatpush.msra.mxu0 %v712
        %753 = vmatpush.msra.mxu0 %v711
        %754 = vmatpush.msra.mxu0 %v710
        %755 = vmatpush.msra.mxu0 %v709
        %756 = vmatpush.msra.mxu0 %v708
        %757 = vmatpush.msra.mxu0 %v707
        %758 = vmatpush.msra.mxu0 %v706
        %759 = vmatmul.f32.gmra.mxu0 %v739
        %v760 = vpop.f32.mrf.mxu0
        %v761 = vadd.f32 0.0, %v760
        %762 = vdwg.mxu0
        %763 = vmatpush.msra.mxu0 %v737
        %764 = vmatpush.msra.mxu0 %v736
        %765 = vmatpush.msra.mxu0 %v735
        %766 = vmatpush.msra.mxu0 %v734
        %767 = vmatpush.msra.mxu0 %v733
        %768 = vmatpush.msra.mxu0 %v732
        %769 = vmatpush.msra.mxu0 %v731
        %770 = vmatpush.msra.mxu0 %v730
        %771 = vmatpush.msra.mxu0 %v729
        %772 = vmatpush.msra.mxu0 %v728
        %773 = vmatpush.msra.mxu0 %v727
        %774 = vmatpush.msra.mxu0 %v726
        %775 = vmatpush.msra.mxu0 %v725
        %776 = vmatpush.msra.mxu0 %v724
        %777 = vmatpush.msra.mxu0 %v723
        %778 = vmatpush.msra.mxu0 %v722
        %779 = vmatmul.f32.gmra.mxu0 %v740
        %v780 = vpop.f32.mrf.mxu0
        %v781 = vadd.f32 %v761, %v780
        %782 = vdwg.mxu0
        %s783 = scalar_lea.vmem %s4, 16
        %v784 = vld [vmem:[%s783] sm:$0xff]
        %v786 = vsel %vm651, %v784, 0
        %v789 = vsel %vm655, %v781, 0
        %791 = vmatpush.msra.mxu0 0.0
        %792 = vmatpush.msra.mxu0 0.0
        %793 = vmatpush.msra.mxu0 0.0
        %794 = vmatpush.msra.mxu0 0.0
        %795 = vmatpush.msra.mxu0 0.0
        %796 = vmatpush.msra.mxu0 0.0
        %797 = vmatpush.msra.mxu0 0.0
        %798 = vmatpush.msra.mxu0 0.0
        %799 = vmatpush.msra.mxu0 0.0
        %800 = vmatpush.msra.mxu0 0.0
        %801 = vmatpush.msra.mxu0 0.0
        %802 = vmatpush.msra.mxu0 0.0
        %803 = vmatpush.msra.mxu0 0.0
        %804 = vmatpush.msra.mxu0 0.0
        %805 = vmatpush.msra.mxu0 0.0
        %806 = vmatpush.msra.mxu0 %v789
        %807 = vmatmul.f32.gmra.mxu0 %v786
        %v808 = vpop.f32.mrf.mxu0
        %v809 = vadd.f32 0.0, %v808
        %810 = vdwg.mxu0
        %v811 = vadd.f32 %v703, %v809
        %s812 = scalar_lea.vmem %s1, 768
        %v813 = vld [vmem:[%s812] sm:$0xff]
        %v814 = vld [vmem:[%s812 + $0x8] sm:$0xff]
        %v815 = vld [vmem:[%s812 + $0x10] sm:$0xff]
        %v816 = vld [vmem:[%s812 + $0x18] sm:$0xff]
        %v817 = vld [vmem:[%s812 + $0x20] sm:$0xff]
        %v818 = vld [vmem:[%s812 + $0x28] sm:$0xff]
        %v819 = vld [vmem:[%s812 + $0x30] sm:$0xff]
        %v820 = vld [vmem:[%s812 + $0x38] sm:$0xff]
        %v821 = vld [vmem:[%s812 + $0x40] sm:$0xff]
        %v822 = vld [vmem:[%s812 + $0x48] sm:$0xff]
        %v823 = vld [vmem:[%s812 + $0x50] sm:$0xff]
        %v824 = vld [vmem:[%s812 + $0x58] sm:$0xff]
        %v825 = vld [vmem:[%s812 + $0x60] sm:$0xff]
        %v826 = vld [vmem:[%s812 + $0x68] sm:$0xff]
        %v827 = vld [vmem:[%s812 + $0x70] sm:$0xff]
        %v828 = vld [vmem:[%s812 + $0x78] sm:$0xff]
        %v829 = vld [vmem:[%s812 + $0x80] sm:$0xff]
        %v830 = vld [vmem:[%s812 + $0x88] sm:$0xff]
        %v831 = vld [vmem:[%s812 + $0x90] sm:$0xff]
        %v832 = vld [vmem:[%s812 + $0x98] sm:$0xff]
        %v833 = vld [vmem:[%s812 + $0xa0] sm:$0xff]
        %v834 = vld [vmem:[%s812 + $0xa8] sm:$0xff]
        %v835 = vld [vmem:[%s812 + $0xb0] sm:$0xff]
        %v836 = vld [vmem:[%s812 + $0xb8] sm:$0xff]
        %v837 = vld [vmem:[%s812 + $0xc0] sm:$0xff]
        %v838 = vld [vmem:[%s812 + $0xc8] sm:$0xff]
        %v839 = vld [vmem:[%s812 + $0xd0] sm:$0xff]
        %v840 = vld [vmem:[%s812 + $0xd8] sm:$0xff]
        %v841 = vld [vmem:[%s812 + $0xe0] sm:$0xff]
        %v842 = vld [vmem:[%s812 + $0xe8] sm:$0xff]
        %v843 = vld [vmem:[%s812 + $0xf0] sm:$0xff]
        %v844 = vld [vmem:[%s812 + $0xf8] sm:$0xff]
        %845 = vst [vmem:[#allocation1] ss:$2 sm:$0xff] %v491
        %v846 = vld.sshfl [vmem:[#allocation1] sm:$0xff pattern:$0x75316420]
        %v847 = vld.sshfl [vmem:[#allocation1 + $0x8] sm:$0xff pattern:$0x75316420]
        %850 = vmatpush.msra.mxu0 %v828
        %851 = vmatpush.msra.mxu0 %v827
        %852 = vmatpush.msra.mxu0 %v826
        %853 = vmatpush.msra.mxu0 %v825
        %854 = vmatpush.msra.mxu0 %v824
        %855 = vmatpush.msra.mxu0 %v823
        %856 = vmatpush.msra.mxu0 %v822
        %857 = vmatpush.msra.mxu0 %v821
        %858 = vmatpush.msra.mxu0 %v820
        %859 = vmatpush.msra.mxu0 %v819
        %860 = vmatpush.msra.mxu0 %v818
        %861 = vmatpush.msra.mxu0 %v817
        %862 = vmatpush.msra.mxu0 %v816
        %863 = vmatpush.msra.mxu0 %v815
        %864 = vmatpush.msra.mxu0 %v814
        %865 = vmatpush.msra.mxu0 %v813
        %866 = vmatmul.f32.gmra.mxu0 %v846
        %v867 = vpop.f32.mrf.mxu0
        %v868 = vadd.f32 0.0, %v867
        %869 = vdwg.mxu0
        %870 = vmatpush.msra.mxu0 %v844
        %871 = vmatpush.msra.mxu0 %v843
        %872 = vmatpush.msra.mxu0 %v842
        %873 = vmatpush.msra.mxu0 %v841
        %874 = vmatpush.msra.mxu0 %v840
        %875 = vmatpush.msra.mxu0 %v839
        %876 = vmatpush.msra.mxu0 %v838
        %877 = vmatpush.msra.mxu0 %v837
        %878 = vmatpush.msra.mxu0 %v836
        %879 = vmatpush.msra.mxu0 %v835
        %880 = vmatpush.msra.mxu0 %v834
        %881 = vmatpush.msra.mxu0 %v833
        %882 = vmatpush.msra.mxu0 %v832
        %883 = vmatpush.msra.mxu0 %v831
        %884 = vmatpush.msra.mxu0 %v830
        %885 = vmatpush.msra.mxu0 %v829
        %886 = vmatmul.f32.gmra.mxu0 %v847
        %v887 = vpop.f32.mrf.mxu0
        %v888 = vadd.f32 %v868, %v887
        %889 = vdwg.mxu0
        %s890 = scalar_lea.vmem %s4, 24
        %v891 = vld [vmem:[%s890] sm:$0xff]
        %v893 = vsel %vm651, %v891, 0
        %v896 = vsel %vm655, %v888, 0
        %898 = vmatpush.msra.mxu0 0.0
        %899 = vmatpush.msra.mxu0 0.0
        %900 = vmatpush.msra.mxu0 0.0
        %901 = vmatpush.msra.mxu0 0.0
        %902 = vmatpush.msra.mxu0 0.0
        %903 = vmatpush.msra.mxu0 0.0
        %904 = vmatpush.msra.mxu0 0.0
        %905 = vmatpush.msra.mxu0 0.0
        %906 = vmatpush.msra.mxu0 0.0
        %907 = vmatpush.msra.mxu0 0.0
        %908 = vmatpush.msra.mxu0 0.0
        %909 = vmatpush.msra.mxu0 0.0
        %910 = vmatpush.msra.mxu0 0.0
        %911 = vmatpush.msra.mxu0 0.0
        %912 = vmatpush.msra.mxu0 0.0
        %913 = vmatpush.msra.mxu0 %v896
        %914 = vmatmul.f32.gmra.mxu0 %v893
        %v915 = vpop.f32.mrf.mxu0
        %v916 = vadd.f32 0.0, %v915
        %917 = vdwg.mxu0
        %v918 = vadd.f32 %v811, %v916
        %s919 = scalar_lea.vmem %s1, 1024
        %v920 = vld [vmem:[%s919] sm:$0xff]
        %v921 = vld [vmem:[%s919 + $0x8] sm:$0xff]
        %v922 = vld [vmem:[%s919 + $0x10] sm:$0xff]
        %v923 = vld [vmem:[%s919 + $0x18] sm:$0xff]
        %v924 = vld [vmem:[%s919 + $0x20] sm:$0xff]
        %v925 = vld [vmem:[%s919 + $0x28] sm:$0xff]
        %v926 = vld [vmem:[%s919 + $0x30] sm:$0xff]
        %v927 = vld [vmem:[%s919 + $0x38] sm:$0xff]
        %v928 = vld [vmem:[%s919 + $0x40] sm:$0xff]
        %v929 = vld [vmem:[%s919 + $0x48] sm:$0xff]
        %v930 = vld [vmem:[%s919 + $0x50] sm:$0xff]
        %v931 = vld [vmem:[%s919 + $0x58] sm:$0xff]
        %v932 = vld [vmem:[%s919 + $0x60] sm:$0xff]
        %v933 = vld [vmem:[%s919 + $0x68] sm:$0xff]
        %v934 = vld [vmem:[%s919 + $0x70] sm:$0xff]
        %v935 = vld [vmem:[%s919 + $0x78] sm:$0xff]
        %v936 = vld [vmem:[%s919 + $0x80] sm:$0xff]
        %v937 = vld [vmem:[%s919 + $0x88] sm:$0xff]
        %v938 = vld [vmem:[%s919 + $0x90] sm:$0xff]
        %v939 = vld [vmem:[%s919 + $0x98] sm:$0xff]
        %v940 = vld [vmem:[%s919 + $0xa0] sm:$0xff]
        %v941 = vld [vmem:[%s919 + $0xa8] sm:$0xff]
        %v942 = vld [vmem:[%s919 + $0xb0] sm:$0xff]
        %v943 = vld [vmem:[%s919 + $0xb8] sm:$0xff]
        %v944 = vld [vmem:[%s919 + $0xc0] sm:$0xff]
        %v945 = vld [vmem:[%s919 + $0xc8] sm:$0xff]
        %v946 = vld [vmem:[%s919 + $0xd0] sm:$0xff]
        %v947 = vld [vmem:[%s919 + $0xd8] sm:$0xff]
        %v948 = vld [vmem:[%s919 + $0xe0] sm:$0xff]
        %v949 = vld [vmem:[%s919 + $0xe8] sm:$0xff]
        %v950 = vld [vmem:[%s919 + $0xf0] sm:$0xff]
        %v951 = vld [vmem:[%s919 + $0xf8] sm:$0xff]
        %952 = vst [vmem:[#allocation1] ss:$2 sm:$0xff] %v491
        %v953 = vld.sshfl [vmem:[#allocation1] sm:$0xff pattern:$0x75316420]
        %v954 = vld.sshfl [vmem:[#allocation1 + $0x8] sm:$0xff pattern:$0x75316420]
        %957 = vmatpush.msra.mxu0 %v935
        %958 = vmatpush.msra.mxu0 %v934
        %959 = vmatpush.msra.mxu0 %v933
        %960 = vmatpush.msra.mxu0 %v932
        %961 = vmatpush.msra.mxu0 %v931
        %962 = vmatpush.msra.mxu0 %v930
        %963 = vmatpush.msra.mxu0 %v929
        %964 = vmatpush.msra.mxu0 %v928
        %965 = vmatpush.msra.mxu0 %v927
        %966 = vmatpush.msra.mxu0 %v926
        %967 = vmatpush.msra.mxu0 %v925
        %968 = vmatpush.msra.mxu0 %v924
        %969 = vmatpush.msra.mxu0 %v923
        %970 = vmatpush.msra.mxu0 %v922
        %971 = vmatpush.msra.mxu0 %v921
        %972 = vmatpush.msra.mxu0 %v920
        %973 = vmatmul.f32.gmra.mxu0 %v953
        %v974 = vpop.f32.mrf.mxu0
        %v975 = vadd.f32 0.0, %v974
        %976 = vdwg.mxu0
        %977 = vmatpush.msra.mxu0 %v951
        %978 = vmatpush.msra.mxu0 %v950
        %979 = vmatpush.msra.mxu0 %v949
        %980 = vmatpush.msra.mxu0 %v948
        %981 = vmatpush.msra.mxu0 %v947
        %982 = vmatpush.msra.mxu0 %v946
        %983 = vmatpush.msra.mxu0 %v945
        %984 = vmatpush.msra.mxu0 %v944
        %985 = vmatpush.msra.mxu0 %v943
        %986 = vmatpush.msra.mxu0 %v942
        %987 = vmatpush.msra.mxu0 %v941
        %988 = vmatpush.msra.mxu0 %v940
        %989 = vmatpush.msra.mxu0 %v939
        %990 = vmatpush.msra.mxu0 %v938
        %991 = vmatpush.msra.mxu0 %v937
        %992 = vmatpush.msra.mxu0 %v936
        %993 = vmatmul.f32.gmra.mxu0 %v954
        %v994 = vpop.f32.mrf.mxu0
        %v995 = vadd.f32 %v975, %v994
        %996 = vdwg.mxu0
        %s997 = scalar_lea.vmem %s4, 32
        %v998 = vld [vmem:[%s997] sm:$0xff]
        %v1000 = vsel %vm651, %v998, 0
        %v1003 = vsel %vm655, %v995, 0
        %1005 = vmatpush.msra.mxu0 0.0
        %1006 = vmatpush.msra.mxu0 0.0
        %1007 = vmatpush.msra.mxu0 0.0
        %1008 = vmatpush.msra.mxu0 0.0
        %1009 = vmatpush.msra.mxu0 0.0
        %1010 = vmatpush.msra.mxu0 0.0
        %1011 = vmatpush.msra.mxu0 0.0
        %1012 = vmatpush.msra.mxu0 0.0
        %1013 = vmatpush.msra.mxu0 0.0
        %1014 = vmatpush.msra.mxu0 0.0
        %1015 = vmatpush.msra.mxu0 0.0
        %1016 = vmatpush.msra.mxu0 0.0
        %1017 = vmatpush.msra.mxu0 0.0
        %1018 = vmatpush.msra.mxu0 0.0
        %1019 = vmatpush.msra.mxu0 0.0
        %1020 = vmatpush.msra.mxu0 %v1003
        %1021 = vmatmul.f32.gmra.mxu0 %v1000
        %v1022 = vpop.f32.mrf.mxu0
        %v1023 = vadd.f32 0.0, %v1022
        %1024 = vdwg.mxu0
        %v1025 = vadd.f32 %v918, %v1023
        %s1026 = scalar_lea.vmem %s1, 1280
        %v1027 = vld [vmem:[%s1026] sm:$0xff]
        %v1028 = vld [vmem:[%s1026 + $0x8] sm:$0xff]
        %v1029 = vld [vmem:[%s1026 + $0x10] sm:$0xff]
        %v1030 = vld [vmem:[%s1026 + $0x18] sm:$0xff]
        %v1031 = vld [vmem:[%s1026 + $0x20] sm:$0xff]
        %v1032 = vld [vmem:[%s1026 + $0x28] sm:$0xff]
        %v1033 = vld [vmem:[%s1026 + $0x30] sm:$0xff]
        %v1034 = vld [vmem:[%s1026 + $0x38] sm:$0xff]
        %v1035 = vld [vmem:[%s1026 + $0x40] sm:$0xff]
        %v1036 = vld [vmem:[%s1026 + $0x48] sm:$0xff]
        %v1037 = vld [vmem:[%s1026 + $0x50] sm:$0xff]
        %v1038 = vld [vmem:[%s1026 + $0x58] sm:$0xff]
        %v1039 = vld [vmem:[%s1026 + $0x60] sm:$0xff]
        %v1040 = vld [vmem:[%s1026 + $0x68] sm:$0xff]
        %v1041 = vld [vmem:[%s1026 + $0x70] sm:$0xff]
        %v1042 = vld [vmem:[%s1026 + $0x78] sm:$0xff]
        %v1043 = vld [vmem:[%s1026 + $0x80] sm:$0xff]
        %v1044 = vld [vmem:[%s1026 + $0x88] sm:$0xff]
        %v1045 = vld [vmem:[%s1026 + $0x90] sm:$0xff]
        %v1046 = vld [vmem:[%s1026 + $0x98] sm:$0xff]
        %v1047 = vld [vmem:[%s1026 + $0xa0] sm:$0xff]
        %v1048 = vld [vmem:[%s1026 + $0xa8] sm:$0xff]
        %v1049 = vld [vmem:[%s1026 + $0xb0] sm:$0xff]
        %v1050 = vld [vmem:[%s1026 + $0xb8] sm:$0xff]
        %v1051 = vld [vmem:[%s1026 + $0xc0] sm:$0xff]
        %v1052 = vld [vmem:[%s1026 + $0xc8] sm:$0xff]
        %v1053 = vld [vmem:[%s1026 + $0xd0] sm:$0xff]
        %v1054 = vld [vmem:[%s1026 + $0xd8] sm:$0xff]
        %v1055 = vld [vmem:[%s1026 + $0xe0] sm:$0xff]
        %v1056 = vld [vmem:[%s1026 + $0xe8] sm:$0xff]
        %v1057 = vld [vmem:[%s1026 + $0xf0] sm:$0xff]
        %v1058 = vld [vmem:[%s1026 + $0xf8] sm:$0xff]
        %1059 = vst [vmem:[#allocation1] ss:$2 sm:$0xff] %v491
        %v1060 = vld.sshfl [vmem:[#allocation1] sm:$0xff pattern:$0x75316420]
        %v1061 = vld.sshfl [vmem:[#allocation1 + $0x8] sm:$0xff pattern:$0x75316420]
        %1064 = vmatpush.msra.mxu0 %v1042
        %1065 = vmatpush.msra.mxu0 %v1041
        %1066 = vmatpush.msra.mxu0 %v1040
        %1067 = vmatpush.msra.mxu0 %v1039
        %1068 = vmatpush.msra.mxu0 %v1038
        %1069 = vmatpush.msra.mxu0 %v1037
        %1070 = vmatpush.msra.mxu0 %v1036
        %1071 = vmatpush.msra.mxu0 %v1035
        %1072 = vmatpush.msra.mxu0 %v1034
        %1073 = vmatpush.msra.mxu0 %v1033
        %1074 = vmatpush.msra.mxu0 %v1032
        %1075 = vmatpush.msra.mxu0 %v1031
        %1076 = vmatpush.msra.mxu0 %v1030
        %1077 = vmatpush.msra.mxu0 %v1029
        %1078 = vmatpush.msra.mxu0 %v1028
        %1079 = vmatpush.msra.mxu0 %v1027
        %1080 = vmatmul.f32.gmra.mxu0 %v1060
        %v1081 = vpop.f32.mrf.mxu0
        %v1082 = vadd.f32 0.0, %v1081
        %1083 = vdwg.mxu0
        %1084 = vmatpush.msra.mxu0 %v1058
        %1085 = vmatpush.msra.mxu0 %v1057
        %1086 = vmatpush.msra.mxu0 %v1056
        %1087 = vmatpush.msra.mxu0 %v1055
        %1088 = vmatpush.msra.mxu0 %v1054
        %1089 = vmatpush.msra.mxu0 %v1053
        %1090 = vmatpush.msra.mxu0 %v1052
        %1091 = vmatpush.msra.mxu0 %v1051
        %1092 = vmatpush.msra.mxu0 %v1050
        %1093 = vmatpush.msra.mxu0 %v1049
        %1094 = vmatpush.msra.mxu0 %v1048
        %1095 = vmatpush.msra.mxu0 %v1047
        %1096 = vmatpush.msra.mxu0 %v1046
        %1097 = vmatpush.msra.mxu0 %v1045
        %1098 = vmatpush.msra.mxu0 %v1044
        %1099 = vmatpush.msra.mxu0 %v1043
        %1100 = vmatmul.f32.gmra.mxu0 %v1061
        %v1101 = vpop.f32.mrf.mxu0
        %v1102 = vadd.f32 %v1082, %v1101
        %1103 = vdwg.mxu0
        %s1104 = scalar_lea.vmem %s4, 40
        %v1105 = vld [vmem:[%s1104] sm:$0xff]
        %v1107 = vsel %vm651, %v1105, 0
        %v1110 = vsel %vm655, %v1102, 0
        %1112 = vmatpush.msra.mxu0 0.0
        %1113 = vmatpush.msra.mxu0 0.0
        %1114 = vmatpush.msra.mxu0 0.0
        %1115 = vmatpush.msra.mxu0 0.0
        %1116 = vmatpush.msra.mxu0 0.0
        %1117 = vmatpush.msra.mxu0 0.0
        %1118 = vmatpush.msra.mxu0 0.0
        %1119 = vmatpush.msra.mxu0 0.0
        %1120 = vmatpush.msra.mxu0 0.0
        %1121 = vmatpush.msra.mxu0 0.0
        %1122 = vmatpush.msra.mxu0 0.0
        %1123 = vmatpush.msra.mxu0 0.0
        %1124 = vmatpush.msra.mxu0 0.0
        %1125 = vmatpush.msra.mxu0 0.0
        %1126 = vmatpush.msra.mxu0 0.0
        %1127 = vmatpush.msra.mxu0 %v1110
        %1128 = vmatmul.f32.gmra.mxu0 %v1107
        %v1129 = vpop.f32.mrf.mxu0
        %v1130 = vadd.f32 0.0, %v1129
        %1131 = vdwg.mxu0
        %v1132 = vadd.f32 %v1025, %v1130
        %s1133 = scalar_lea.vmem %s1, 1536
        %v1134 = vld [vmem:[%s1133] sm:$0xff]
        %v1135 = vld [vmem:[%s1133 + $0x8] sm:$0xff]
        %v1136 = vld [vmem:[%s1133 + $0x10] sm:$0xff]
        %v1137 = vld [vmem:[%s1133 + $0x18] sm:$0xff]
        %v1138 = vld [vmem:[%s1133 + $0x20] sm:$0xff]
        %v1139 = vld [vmem:[%s1133 + $0x28] sm:$0xff]
        %v1140 = vld [vmem:[%s1133 + $0x30] sm:$0xff]
        %v1141 = vld [vmem:[%s1133 + $0x38] sm:$0xff]
        %v1142 = vld [vmem:[%s1133 + $0x40] sm:$0xff]
        %v1143 = vld [vmem:[%s1133 + $0x48] sm:$0xff]
        %v1144 = vld [vmem:[%s1133 + $0x50] sm:$0xff]
        %v1145 = vld [vmem:[%s1133 + $0x58] sm:$0xff]
        %v1146 = vld [vmem:[%s1133 + $0x60] sm:$0xff]
        %v1147 = vld [vmem:[%s1133 + $0x68] sm:$0xff]
        %v1148 = vld [vmem:[%s1133 + $0x70] sm:$0xff]
        %v1149 = vld [vmem:[%s1133 + $0x78] sm:$0xff]
        %v1150 = vld [vmem:[%s1133 + $0x80] sm:$0xff]
        %v1151 = vld [vmem:[%s1133 + $0x88] sm:$0xff]
        %v1152 = vld [vmem:[%s1133 + $0x90] sm:$0xff]
        %v1153 = vld [vmem:[%s1133 + $0x98] sm:$0xff]
        %v1154 = vld [vmem:[%s1133 + $0xa0] sm:$0xff]
        %v1155 = vld [vmem:[%s1133 + $0xa8] sm:$0xff]
        %v1156 = vld [vmem:[%s1133 + $0xb0] sm:$0xff]
        %v1157 = vld [vmem:[%s1133 + $0xb8] sm:$0xff]
        %v1158 = vld [vmem:[%s1133 + $0xc0] sm:$0xff]
        %v1159 = vld [vmem:[%s1133 + $0xc8] sm:$0xff]
        %v1160 = vld [vmem:[%s1133 + $0xd0] sm:$0xff]
        %v1161 = vld [vmem:[%s1133 + $0xd8] sm:$0xff]
        %v1162 = vld [vmem:[%s1133 + $0xe0] sm:$0xff]
        %v1163 = vld [vmem:[%s1133 + $0xe8] sm:$0xff]
        %v1164 = vld [vmem:[%s1133 + $0xf0] sm:$0xff]
        %v1165 = vld [vmem:[%s1133 + $0xf8] sm:$0xff]
        %1166 = vst [vmem:[#allocation1] ss:$2 sm:$0xff] %v491
        %v1167 = vld.sshfl [vmem:[#allocation1] sm:$0xff pattern:$0x75316420]
        %v1168 = vld.sshfl [vmem:[#allocation1 + $0x8] sm:$0xff pattern:$0x75316420]
        %1171 = vmatpush.msra.mxu0 %v1149
        %1172 = vmatpush.msra.mxu0 %v1148
        %1173 = vmatpush.msra.mxu0 %v1147
        %1174 = vmatpush.msra.mxu0 %v1146
        %1175 = vmatpush.msra.mxu0 %v1145
        %1176 = vmatpush.msra.mxu0 %v1144
        %1177 = vmatpush.msra.mxu0 %v1143
        %1178 = vmatpush.msra.mxu0 %v1142
        %1179 = vmatpush.msra.mxu0 %v1141
        %1180 = vmatpush.msra.mxu0 %v1140
        %1181 = vmatpush.msra.mxu0 %v1139
        %1182 = vmatpush.msra.mxu0 %v1138
        %1183 = vmatpush.msra.mxu0 %v1137
        %1184 = vmatpush.msra.mxu0 %v1136
        %1185 = vmatpush.msra.mxu0 %v1135
        %1186 = vmatpush.msra.mxu0 %v1134
        %1187 = vmatmul.f32.gmra.mxu0 %v1167
        %v1188 = vpop.f32.mrf.mxu0
        %v1189 = vadd.f32 0.0, %v1188
        %1190 = vdwg.mxu0
        %1191 = vmatpush.msra.mxu0 %v1165
        %1192 = vmatpush.msra.mxu0 %v1164
        %1193 = vmatpush.msra.mxu0 %v1163
        %1194 = vmatpush.msra.mxu0 %v1162
        %1195 = vmatpush.msra.mxu0 %v1161
        %1196 = vmatpush.msra.mxu0 %v1160
        %1197 = vmatpush.msra.mxu0 %v1159
        %1198 = vmatpush.msra.mxu0 %v1158
        %1199 = vmatpush.msra.mxu0 %v1157
        %1200 = vmatpush.msra.mxu0 %v1156
        %1201 = vmatpush.msra.mxu0 %v1155
        %1202 = vmatpush.msra.mxu0 %v1154
        %1203 = vmatpush.msra.mxu0 %v1153
        %1204 = vmatpush.msra.mxu0 %v1152
        %1205 = vmatpush.msra.mxu0 %v1151
        %1206 = vmatpush.msra.mxu0 %v1150
        %1207 = vmatmul.f32.gmra.mxu0 %v1168
        %v1208 = vpop.f32.mrf.mxu0
        %v1209 = vadd.f32 %v1189, %v1208
        %1210 = vdwg.mxu0
        %s1211 = scalar_lea.vmem %s4, 48
        %v1212 = vld [vmem:[%s1211] sm:$0xff]
        %v1214 = vsel %vm651, %v1212, 0
        %v1217 = vsel %vm655, %v1209, 0
        %1219 = vmatpush.msra.mxu0 0.0
        %1220 = vmatpush.msra.mxu0 0.0
        %1221 = vmatpush.msra.mxu0 0.0
        %1222 = vmatpush.msra.mxu0 0.0
        %1223 = vmatpush.msra.mxu0 0.0
        %1224 = vmatpush.msra.mxu0 0.0
        %1225 = vmatpush.msra.mxu0 0.0
        %1226 = vmatpush.msra.mxu0 0.0
        %1227 = vmatpush.msra.mxu0 0.0
        %1228 = vmatpush.msra.mxu0 0.0
        %1229 = vmatpush.msra.mxu0 0.0
        %1230 = vmatpush.msra.mxu0 0.0
        %1231 = vmatpush.msra.mxu0 0.0
        %1232 = vmatpush.msra.mxu0 0.0
        %1233 = vmatpush.msra.mxu0 0.0
        %1234 = vmatpush.msra.mxu0 %v1217
        %1235 = vmatmul.f32.gmra.mxu0 %v1214
        %v1236 = vpop.f32.mrf.mxu0
        %v1237 = vadd.f32 0.0, %v1236
        %1238 = vdwg.mxu0
        %v1239 = vadd.f32 %v1132, %v1237
        %s1240 = scalar_lea.vmem %s1, 1792
        %v1241 = vld [vmem:[%s1240] sm:$0xff]
        %v1242 = vld [vmem:[%s1240 + $0x8] sm:$0xff]
        %v1243 = vld [vmem:[%s1240 + $0x10] sm:$0xff]
        %v1244 = vld [vmem:[%s1240 + $0x18] sm:$0xff]
        %v1245 = vld [vmem:[%s1240 + $0x20] sm:$0xff]
        %v1246 = vld [vmem:[%s1240 + $0x28] sm:$0xff]
        %v1247 = vld [vmem:[%s1240 + $0x30] sm:$0xff]
        %v1248 = vld [vmem:[%s1240 + $0x38] sm:$0xff]
        %v1249 = vld [vmem:[%s1240 + $0x40] sm:$0xff]
        %v1250 = vld [vmem:[%s1240 + $0x48] sm:$0xff]
        %v1251 = vld [vmem:[%s1240 + $0x50] sm:$0xff]
        %v1252 = vld [vmem:[%s1240 + $0x58] sm:$0xff]
        %v1253 = vld [vmem:[%s1240 + $0x60] sm:$0xff]
        %v1254 = vld [vmem:[%s1240 + $0x68] sm:$0xff]
        %v1255 = vld [vmem:[%s1240 + $0x70] sm:$0xff]
        %v1256 = vld [vmem:[%s1240 + $0x78] sm:$0xff]
        %v1257 = vld [vmem:[%s1240 + $0x80] sm:$0xff]
        %v1258 = vld [vmem:[%s1240 + $0x88] sm:$0xff]
        %v1259 = vld [vmem:[%s1240 + $0x90] sm:$0xff]
        %v1260 = vld [vmem:[%s1240 + $0x98] sm:$0xff]
        %v1261 = vld [vmem:[%s1240 + $0xa0] sm:$0xff]
        %v1262 = vld [vmem:[%s1240 + $0xa8] sm:$0xff]
        %v1263 = vld [vmem:[%s1240 + $0xb0] sm:$0xff]
        %v1264 = vld [vmem:[%s1240 + $0xb8] sm:$0xff]
        %v1265 = vld [vmem:[%s1240 + $0xc0] sm:$0xff]
        %v1266 = vld [vmem:[%s1240 + $0xc8] sm:$0xff]
        %v1267 = vld [vmem:[%s1240 + $0xd0] sm:$0xff]
        %v1268 = vld [vmem:[%s1240 + $0xd8] sm:$0xff]
        %v1269 = vld [vmem:[%s1240 + $0xe0] sm:$0xff]
        %v1270 = vld [vmem:[%s1240 + $0xe8] sm:$0xff]
        %v1271 = vld [vmem:[%s1240 + $0xf0] sm:$0xff]
        %v1272 = vld [vmem:[%s1240 + $0xf8] sm:$0xff]
        %1273 = vst [vmem:[#allocation1] ss:$2 sm:$0xff] %v491
        %v1274 = vld.sshfl [vmem:[#allocation1] sm:$0xff pattern:$0x75316420]
        %v1275 = vld.sshfl [vmem:[#allocation1 + $0x8] sm:$0xff pattern:$0x75316420]
        %1278 = vmatpush.msra.mxu0 %v1256
        %1279 = vmatpush.msra.mxu0 %v1255
        %1280 = vmatpush.msra.mxu0 %v1254
        %1281 = vmatpush.msra.mxu0 %v1253
        %1282 = vmatpush.msra.mxu0 %v1252
        %1283 = vmatpush.msra.mxu0 %v1251
        %1284 = vmatpush.msra.mxu0 %v1250
        %1285 = vmatpush.msra.mxu0 %v1249
        %1286 = vmatpush.msra.mxu0 %v1248
        %1287 = vmatpush.msra.mxu0 %v1247
        %1288 = vmatpush.msra.mxu0 %v1246
        %1289 = vmatpush.msra.mxu0 %v1245
        %1290 = vmatpush.msra.mxu0 %v1244
        %1291 = vmatpush.msra.mxu0 %v1243
        %1292 = vmatpush.msra.mxu0 %v1242
        %1293 = vmatpush.msra.mxu0 %v1241
        %1294 = vmatmul.f32.gmra.mxu0 %v1274
        %v1295 = vpop.f32.mrf.mxu0
        %v1296 = vadd.f32 0.0, %v1295
        %1297 = vdwg.mxu0
        %1298 = vmatpush.msra.mxu0 %v1272
        %1299 = vmatpush.msra.mxu0 %v1271
        %1300 = vmatpush.msra.mxu0 %v1270
        %1301 = vmatpush.msra.mxu0 %v1269
        %1302 = vmatpush.msra.mxu0 %v1268
        %1303 = vmatpush.msra.mxu0 %v1267
        %1304 = vmatpush.msra.mxu0 %v1266
        %1305 = vmatpush.msra.mxu0 %v1265
        %1306 = vmatpush.msra.mxu0 %v1264
        %1307 = vmatpush.msra.mxu0 %v1263
        %1308 = vmatpush.msra.mxu0 %v1262
        %1309 = vmatpush.msra.mxu0 %v1261
        %1310 = vmatpush.msra.mxu0 %v1260
        %1311 = vmatpush.msra.mxu0 %v1259
        %1312 = vmatpush.msra.mxu0 %v1258
        %1313 = vmatpush.msra.mxu0 %v1257
        %1314 = vmatmul.f32.gmra.mxu0 %v1275
        %v1315 = vpop.f32.mrf.mxu0
        %v1316 = vadd.f32 %v1296, %v1315
        %1317 = vdwg.mxu0
        %s1318 = scalar_lea.vmem %s4, 56
        %v1319 = vld [vmem:[%s1318] sm:$0xff]
        %v1321 = vsel %vm651, %v1319, 0
        %v1324 = vsel %vm655, %v1316, 0
        %1326 = vmatpush.msra.mxu0 0.0
        %1327 = vmatpush.msra.mxu0 0.0
        %1328 = vmatpush.msra.mxu0 0.0
        %1329 = vmatpush.msra.mxu0 0.0
        %1330 = vmatpush.msra.mxu0 0.0
        %1331 = vmatpush.msra.mxu0 0.0
        %1332 = vmatpush.msra.mxu0 0.0
        %1333 = vmatpush.msra.mxu0 0.0
        %1334 = vmatpush.msra.mxu0 0.0
        %1335 = vmatpush.msra.mxu0 0.0
        %1336 = vmatpush.msra.mxu0 0.0
        %1337 = vmatpush.msra.mxu0 0.0
        %1338 = vmatpush.msra.mxu0 0.0
        %1339 = vmatpush.msra.mxu0 0.0
        %1340 = vmatpush.msra.mxu0 0.0
        %1341 = vmatpush.msra.mxu0 %v1324
        %1342 = vmatmul.f32.gmra.mxu0 %v1321
        %v1343 = vpop.f32.mrf.mxu0
        %v1344 = vadd.f32 0.0, %v1343
        %1345 = vdwg.mxu0
        %v1346 = vadd.f32 %v1239, %v1344
        %s1347 = scalar_lea.vmem %s1, 2048
        %v1348 = vld [vmem:[%s1347] sm:$0xff]
        %v1349 = vld [vmem:[%s1347 + $0x8] sm:$0xff]
        %v1350 = vld [vmem:[%s1347 + $0x10] sm:$0xff]
        %v1351 = vld [vmem:[%s1347 + $0x18] sm:$0xff]
        %v1352 = vld [vmem:[%s1347 + $0x20] sm:$0xff]
        %v1353 = vld [vmem:[%s1347 + $0x28] sm:$0xff]
        %v1354 = vld [vmem:[%s1347 + $0x30] sm:$0xff]
        %v1355 = vld [vmem:[%s1347 + $0x38] sm:$0xff]
        %v1356 = vld [vmem:[%s1347 + $0x40] sm:$0xff]
        %v1357 = vld [vmem:[%s1347 + $0x48] sm:$0xff]
        %v1358 = vld [vmem:[%s1347 + $0x50] sm:$0xff]
        %v1359 = vld [vmem:[%s1347 + $0x58] sm:$0xff]
        %v1360 = vld [vmem:[%s1347 + $0x60] sm:$0xff]
        %v1361 = vld [vmem:[%s1347 + $0x68] sm:$0xff]
        %v1362 = vld [vmem:[%s1347 + $0x70] sm:$0xff]
        %v1363 = vld [vmem:[%s1347 + $0x78] sm:$0xff]
        %v1364 = vld [vmem:[%s1347 + $0x80] sm:$0xff]
        %v1365 = vld [vmem:[%s1347 + $0x88] sm:$0xff]
        %v1366 = vld [vmem:[%s1347 + $0x90] sm:$0xff]
        %v1367 = vld [vmem:[%s1347 + $0x98] sm:$0xff]
        %v1368 = vld [vmem:[%s1347 + $0xa0] sm:$0xff]
        %v1369 = vld [vmem:[%s1347 + $0xa8] sm:$0xff]
        %v1370 = vld [vmem:[%s1347 + $0xb0] sm:$0xff]
        %v1371 = vld [vmem:[%s1347 + $0xb8] sm:$0xff]
        %v1372 = vld [vmem:[%s1347 + $0xc0] sm:$0xff]
        %v1373 = vld [vmem:[%s1347 + $0xc8] sm:$0xff]
        %v1374 = vld [vmem:[%s1347 + $0xd0] sm:$0xff]
        %v1375 = vld [vmem:[%s1347 + $0xd8] sm:$0xff]
        %v1376 = vld [vmem:[%s1347 + $0xe0] sm:$0xff]
        %v1377 = vld [vmem:[%s1347 + $0xe8] sm:$0xff]
        %v1378 = vld [vmem:[%s1347 + $0xf0] sm:$0xff]
        %v1379 = vld [vmem:[%s1347 + $0xf8] sm:$0xff]
        %1380 = vst [vmem:[#allocation1] ss:$2 sm:$0xff] %v491
        %v1381 = vld.sshfl [vmem:[#allocation1] sm:$0xff pattern:$0x75316420]
        %v1382 = vld.sshfl [vmem:[#allocation1 + $0x8] sm:$0xff pattern:$0x75316420]
        %1385 = vmatpush.msra.mxu0 %v1363
        %1386 = vmatpush.msra.mxu0 %v1362
        %1387 = vmatpush.msra.mxu0 %v1361
        %1388 = vmatpush.msra.mxu0 %v1360
        %1389 = vmatpush.msra.mxu0 %v1359
        %1390 = vmatpush.msra.mxu0 %v1358
        %1391 = vmatpush.msra.mxu0 %v1357
        %1392 = vmatpush.msra.mxu0 %v1356
        %1393 = vmatpush.msra.mxu0 %v1355
        %1394 = vmatpush.msra.mxu0 %v1354
        %1395 = vmatpush.msra.mxu0 %v1353
        %1396 = vmatpush.msra.mxu0 %v1352
        %1397 = vmatpush.msra.mxu0 %v1351
        %1398 = vmatpush.msra.mxu0 %v1350
        %1399 = vmatpush.msra.mxu0 %v1349
        %1400 = vmatpush.msra.mxu0 %v1348
        %1401 = vmatmul.f32.gmra.mxu0 %v1381
        %v1402 = vpop.f32.mrf.mxu0
        %v1403 = vadd.f32 0.0, %v1402
        %1404 = vdwg.mxu0
        %1405 = vmatpush.msra.mxu0 %v1379
        %1406 = vmatpush.msra.mxu0 %v1378
        %1407 = vmatpush.msra.mxu0 %v1377
        %1408 = vmatpush.msra.mxu0 %v1376
        %1409 = vmatpush.msra.mxu0 %v1375
        %1410 = vmatpush.msra.mxu0 %v1374
        %1411 = vmatpush.msra.mxu0 %v1373
        %1412 = vmatpush.msra.mxu0 %v1372
        %1413 = vmatpush.msra.mxu0 %v1371
        %1414 = vmatpush.msra.mxu0 %v1370
        %1415 = vmatpush.msra.mxu0 %v1369
        %1416 = vmatpush.msra.mxu0 %v1368
        %1417 = vmatpush.msra.mxu0 %v1367
        %1418 = vmatpush.msra.mxu0 %v1366
        %1419 = vmatpush.msra.mxu0 %v1365
        %1420 = vmatpush.msra.mxu0 %v1364
        %1421 = vmatmul.f32.gmra.mxu0 %v1382
        %v1422 = vpop.f32.mrf.mxu0
        %v1423 = vadd.f32 %v1403, %v1422
        %1424 = vdwg.mxu0
        %s1425 = scalar_lea.vmem %s4, 64
        %v1426 = vld [vmem:[%s1425] sm:$0xff]
        %v1428 = vsel %vm651, %v1426, 0
        %v1431 = vsel %vm655, %v1423, 0
        %1433 = vmatpush.msra.mxu0 0.0
        %1434 = vmatpush.msra.mxu0 0.0
        %1435 = vmatpush.msra.mxu0 0.0
        %1436 = vmatpush.msra.mxu0 0.0
        %1437 = vmatpush.msra.mxu0 0.0
        %1438 = vmatpush.msra.mxu0 0.0
        %1439 = vmatpush.msra.mxu0 0.0
        %1440 = vmatpush.msra.mxu0 0.0
        %1441 = vmatpush.msra.mxu0 0.0
        %1442 = vmatpush.msra.mxu0 0.0
        %1443 = vmatpush.msra.mxu0 0.0
        %1444 = vmatpush.msra.mxu0 0.0
        %1445 = vmatpush.msra.mxu0 0.0
        %1446 = vmatpush.msra.mxu0 0.0
        %1447 = vmatpush.msra.mxu0 0.0
        %1448 = vmatpush.msra.mxu0 %v1431
        %1449 = vmatmul.f32.gmra.mxu0 %v1428
        %v1450 = vpop.f32.mrf.mxu0
        %v1451 = vadd.f32 0.0, %v1450
        %1452 = vdwg.mxu0
        %v1453 = vadd.f32 %v1346, %v1451
        %v1454 = vld [vmem:[%s5] sm:$0xff]
        %1456 = vset.pattern.permute.xlu0 0
        %1457 = vperm.xlu0 %1456, %v1454
        %v1458 = vpop.permute.xlu0 %1457
        %v1460 = vadd.f32 %v1453, %v1458
        %v1461 = vmax.f32 %v1460, 0.0
        %v1462 = vld [vmem:[%s2] sm:$0xff]
        %v1463 = vld [vmem:[%s2 + $0x8] sm:$0xff]
        %v1464 = vld [vmem:[%s2 + $0x10] sm:$0xff]
        %v1465 = vld [vmem:[%s2 + $0x18] sm:$0xff]
        %v1466 = vld [vmem:[%s2 + $0x20] sm:$0xff]
        %v1467 = vld [vmem:[%s2 + $0x28] sm:$0xff]
        %v1468 = vld [vmem:[%s2 + $0x30] sm:$0xff]
        %v1469 = vld [vmem:[%s2 + $0x38] sm:$0xff]
        %vm1470 = vcmask 523264
        %v1472 = vsel %vm1470, %v1461, 0
        %1474 = vmatpush.msra.mxu0 0.0
        %1475 = vmatpush.msra.mxu0 0.0
        %1476 = vmatpush.msra.mxu0 0.0
        %1477 = vmatpush.msra.mxu0 0.0
        %1478 = vmatpush.msra.mxu0 0.0
        %1479 = vmatpush.msra.mxu0 0.0
        %1480 = vmatpush.msra.mxu0 0.0
        %1481 = vmatpush.msra.mxu0 0.0
        %1482 = vmatpush.msra.mxu0 %v1469
        %1483 = vmatpush.msra.mxu0 %v1468
        %1484 = vmatpush.msra.mxu0 %v1467
        %1485 = vmatpush.msra.mxu0 %v1466
        %1486 = vmatpush.msra.mxu0 %v1465
        %1487 = vmatpush.msra.mxu0 %v1464
        %1488 = vmatpush.msra.mxu0 %v1463
        %1489 = vmatpush.msra.mxu0 %v1462
        %1490 = vmatmul.f32.gmra.mxu0 %v1472
        %v1491 = vpop.f32.mrf.mxu0
        %v1492 = vadd.f32 0.0, %v1491
        %1493 = vdwg.mxu0
        %v1494 = vld [vmem:[%s6] sm:$0xff]
        %s1495 = scalar_lea.vmem %s2, 64
        %v1496 = vld [vmem:[%s1495] sm:$0xff]
        %v1497 = vld [vmem:[%s1495 + $0x8] sm:$0xff]
        %v1498 = vld [vmem:[%s1495 + $0x10] sm:$0xff]
        %v1499 = vld [vmem:[%s1495 + $0x18] sm:$0xff]
        %v1500 = vld [vmem:[%s1495 + $0x20] sm:$0xff]
        %v1501 = vld [vmem:[%s1495 + $0x28] sm:$0xff]
        %v1502 = vld [vmem:[%s1495 + $0x30] sm:$0xff]
        %v1503 = vld [vmem:[%s1495 + $0x38] sm:$0xff]
        %1504 = vmatpush.msra.mxu0 0.0
        %1505 = vmatpush.msra.mxu0 0.0
        %1506 = vmatpush.msra.mxu0 0.0
        %1507 = vmatpush.msra.mxu0 0.0
        %1508 = vmatpush.msra.mxu0 0.0
        %1509 = vmatpush.msra.mxu0 0.0
        %1510 = vmatpush.msra.mxu0 0.0
        %1511 = vmatpush.msra.mxu0 0.0
        %1512 = vmatpush.msra.mxu0 %v1503
        %1513 = vmatpush.msra.mxu0 %v1502
        %1514 = vmatpush.msra.mxu0 %v1501
        %1515 = vmatpush.msra.mxu0 %v1500
        %1516 = vmatpush.msra.mxu0 %v1499
        %1517 = vmatpush.msra.mxu0 %v1498
        %1518 = vmatpush.msra.mxu0 %v1497
        %1519 = vmatpush.msra.mxu0 %v1496
        %1520 = vmatmul.f32.gmra.mxu0 %v1472
        %v1521 = vpop.f32.mrf.mxu0
        %v1522 = vadd.f32 0.0, %v1521
        %1523 = vdwg.mxu0
        %s1524 = scalar_lea.vmem %s6, 8
        %v1525 = vld [vmem:[%s1524] sm:$0xff]
        %vm1526 = vcmask 64512
        %v1528 = vsel %vm1526, %v1525, 0
        %1530 = vmatpush.msra.mxu0 0.0
        %1531 = vmatpush.msra.mxu0 0.0
        %1532 = vmatpush.msra.mxu0 0.0
        %1533 = vmatpush.msra.mxu0 0.0
        %1534 = vmatpush.msra.mxu0 0.0
        %1535 = vmatpush.msra.mxu0 0.0
        %1536 = vmatpush.msra.mxu0 0.0
        %1537 = vmatpush.msra.mxu0 0.0
        %1538 = vmatpush.msra.mxu0 0.0
        %1539 = vmatpush.msra.mxu0 0.0
        %1540 = vmatpush.msra.mxu0 0.0
        %1541 = vmatpush.msra.mxu0 0.0
        %1542 = vmatpush.msra.mxu0 0.0
        %1543 = vmatpush.msra.mxu0 0.0
        %1544 = vmatpush.msra.mxu0 0.0
        %1545 = vmatpush.msra.mxu0 %v1522
        %1546 = vmatmul.f32.gmra.mxu0 %v1528
        %v1547 = vpop.f32.mrf.mxu0
        %v1548 = vadd.f32 0.0, %v1547
        %1549 = vdwg.mxu0
        %v1551 = vsel %vm1526, %v1494, 0
        %1553 = vmatpush.msra.mxu0 0.0
        %1554 = vmatpush.msra.mxu0 0.0
        %1555 = vmatpush.msra.mxu0 0.0
        %1556 = vmatpush.msra.mxu0 0.0
        %1557 = vmatpush.msra.mxu0 0.0
        %1558 = vmatpush.msra.mxu0 0.0
        %1559 = vmatpush.msra.mxu0 0.0
        %1560 = vmatpush.msra.mxu0 0.0
        %1561 = vmatpush.msra.mxu0 0.0
        %1562 = vmatpush.msra.mxu0 0.0
        %1563 = vmatpush.msra.mxu0 0.0
        %1564 = vmatpush.msra.mxu0 0.0
        %1565 = vmatpush.msra.mxu0 0.0
        %1566 = vmatpush.msra.mxu0 0.0
        %1567 = vmatpush.msra.mxu0 0.0
        %1568 = vmatpush.msra.mxu0 %v1492
        %1569 = vmatmul.f32.gmra.mxu0 %v1551
        %v1570 = vpop.f32.mrf.mxu0
        %v1571 = vadd.f32 %v1548, %v1570
        %1572 = vdwg.mxu0
        %s1573 = scalar_lea.vmem %s2, 128
        %v1574 = vld [vmem:[%s1573] sm:$0xff]
        %v1575 = vld [vmem:[%s1573 + $0x8] sm:$0xff]
        %v1576 = vld [vmem:[%s1573 + $0x10] sm:$0xff]
        %v1577 = vld [vmem:[%s1573 + $0x18] sm:$0xff]
        %v1578 = vld [vmem:[%s1573 + $0x20] sm:$0xff]
        %v1579 = vld [vmem:[%s1573 + $0x28] sm:$0xff]
        %v1580 = vld [vmem:[%s1573 + $0x30] sm:$0xff]
        %v1581 = vld [vmem:[%s1573 + $0x38] sm:$0xff]
        %1582 = vmatpush.msra.mxu0 0.0
        %1583 = vmatpush.msra.mxu0 0.0
        %1584 = vmatpush.msra.mxu0 0.0
        %1585 = vmatpush.msra.mxu0 0.0
        %1586 = vmatpush.msra.mxu0 0.0
        %1587 = vmatpush.msra.mxu0 0.0
        %1588 = vmatpush.msra.mxu0 0.0
        %1589 = vmatpush.msra.mxu0 0.0
        %1590 = vmatpush.msra.mxu0 %v1581
        %1591 = vmatpush.msra.mxu0 %v1580
        %1592 = vmatpush.msra.mxu0 %v1579
        %1593 = vmatpush.msra.mxu0 %v1578
        %1594 = vmatpush.msra.mxu0 %v1577
        %1595 = vmatpush.msra.mxu0 %v1576
        %1596 = vmatpush.msra.mxu0 %v1575
        %1597 = vmatpush.msra.mxu0 %v1574
        %1598 = vmatmul.f32.gmra.mxu0 %v1472
        %v1599 = vpop.f32.mrf.mxu0
        %v1600 = vadd.f32 0.0, %v1599
        %1601 = vdwg.mxu0
        %s1602 = scalar_lea.vmem %s6, 16
        %v1603 = vld [vmem:[%s1602] sm:$0xff]
        %v1605 = vsel %vm1526, %v1603, 0
        %1607 = vmatpush.msra.mxu0 0.0
        %1608 = vmatpush.msra.mxu0 0.0
        %1609 = vmatpush.msra.mxu0 0.0
        %1610 = vmatpush.msra.mxu0 0.0
        %1611 = vmatpush.msra.mxu0 0.0
        %1612 = vmatpush.msra.mxu0 0.0
        %1613 = vmatpush.msra.mxu0 0.0
        %1614 = vmatpush.msra.mxu0 0.0
        %1615 = vmatpush.msra.mxu0 0.0
        %1616 = vmatpush.msra.mxu0 0.0
        %1617 = vmatpush.msra.mxu0 0.0
        %1618 = vmatpush.msra.mxu0 0.0
        %1619 = vmatpush.msra.mxu0 0.0
        %1620 = vmatpush.msra.mxu0 0.0
        %1621 = vmatpush.msra.mxu0 0.0
        %1622 = vmatpush.msra.mxu0 %v1600
        %1623 = vmatmul.f32.gmra.mxu0 %v1605
        %v1624 = vpop.f32.mrf.mxu0
        %v1625 = vadd.f32 0.0, %v1624
        %1626 = vdwg.mxu0
        %v1627 = vadd.f32 %v1571, %v1625
        %s1628 = scalar_lea.vmem %s2, 192
        %v1629 = vld [vmem:[%s1628] sm:$0xff]
        %v1630 = vld [vmem:[%s1628 + $0x8] sm:$0xff]
        %v1631 = vld [vmem:[%s1628 + $0x10] sm:$0xff]
        %v1632 = vld [vmem:[%s1628 + $0x18] sm:$0xff]
        %v1633 = vld [vmem:[%s1628 + $0x20] sm:$0xff]
        %v1634 = vld [vmem:[%s1628 + $0x28] sm:$0xff]
        %v1635 = vld [vmem:[%s1628 + $0x30] sm:$0xff]
        %v1636 = vld [vmem:[%s1628 + $0x38] sm:$0xff]
        %1637 = vmatpush.msra.mxu0 0.0
        %1638 = vmatpush.msra.mxu0 0.0
        %1639 = vmatpush.msra.mxu0 0.0
        %1640 = vmatpush.msra.mxu0 0.0
        %1641 = vmatpush.msra.mxu0 0.0
        %1642 = vmatpush.msra.mxu0 0.0
        %1643 = vmatpush.msra.mxu0 0.0
        %1644 = vmatpush.msra.mxu0 0.0
        %1645 = vmatpush.msra.mxu0 %v1636
        %1646 = vmatpush.msra.mxu0 %v1635
        %1647 = vmatpush.msra.mxu0 %v1634
        %1648 = vmatpush.msra.mxu0 %v1633
        %1649 = vmatpush.msra.mxu0 %v1632
        %1650 = vmatpush.msra.mxu0 %v1631
        %1651 = vmatpush.msra.mxu0 %v1630
        %1652 = vmatpush.msra.mxu0 %v1629
        %1653 = vmatmul.f32.gmra.mxu0 %v1472
        %v1654 = vpop.f32.mrf.mxu0
        %v1655 = vadd.f32 0.0, %v1654
        %1656 = vdwg.mxu0
        %s1657 = scalar_lea.vmem %s6, 24
        %v1658 = vld [vmem:[%s1657] sm:$0xff]
        %v1660 = vsel %vm1526, %v1658, 0
        %1662 = vmatpush.msra.mxu0 0.0
        %1663 = vmatpush.msra.mxu0 0.0
        %1664 = vmatpush.msra.mxu0 0.0
        %1665 = vmatpush.msra.mxu0 0.0
        %1666 = vmatpush.msra.mxu0 0.0
        %1667 = vmatpush.msra.mxu0 0.0
        %1668 = vmatpush.msra.mxu0 0.0
        %1669 = vmatpush.msra.mxu0 0.0
        %1670 = vmatpush.msra.mxu0 0.0
        %1671 = vmatpush.msra.mxu0 0.0
        %1672 = vmatpush.msra.mxu0 0.0
        %1673 = vmatpush.msra.mxu0 0.0
        %1674 = vmatpush.msra.mxu0 0.0
        %1675 = vmatpush.msra.mxu0 0.0
        %1676 = vmatpush.msra.mxu0 0.0
        %1677 = vmatpush.msra.mxu0 %v1655
        %1678 = vmatmul.f32.gmra.mxu0 %v1660
        %v1679 = vpop.f32.mrf.mxu0
        %v1680 = vadd.f32 0.0, %v1679
        %1681 = vdwg.mxu0
        %v1682 = vadd.f32 %v1627, %v1680
        %s1683 = scalar_lea.vmem %s2, 256
        %v1684 = vld [vmem:[%s1683] sm:$0xff]
        %v1685 = vld [vmem:[%s1683 + $0x8] sm:$0xff]
        %v1686 = vld [vmem:[%s1683 + $0x10] sm:$0xff]
        %v1687 = vld [vmem:[%s1683 + $0x18] sm:$0xff]
        %v1688 = vld [vmem:[%s1683 + $0x20] sm:$0xff]
        %v1689 = vld [vmem:[%s1683 + $0x28] sm:$0xff]
        %v1690 = vld [vmem:[%s1683 + $0x30] sm:$0xff]
        %v1691 = vld [vmem:[%s1683 + $0x38] sm:$0xff]
        %1692 = vmatpush.msra.mxu0 0.0
        %1693 = vmatpush.msra.mxu0 0.0
        %1694 = vmatpush.msra.mxu0 0.0
        %1695 = vmatpush.msra.mxu0 0.0
        %1696 = vmatpush.msra.mxu0 0.0
        %1697 = vmatpush.msra.mxu0 0.0
        %1698 = vmatpush.msra.mxu0 0.0
        %1699 = vmatpush.msra.mxu0 0.0
        %1700 = vmatpush.msra.mxu0 %v1691
        %1701 = vmatpush.msra.mxu0 %v1690
        %1702 = vmatpush.msra.mxu0 %v1689
        %1703 = vmatpush.msra.mxu0 %v1688
        %1704 = vmatpush.msra.mxu0 %v1687
        %1705 = vmatpush.msra.mxu0 %v1686
        %1706 = vmatpush.msra.mxu0 %v1685
        %1707 = vmatpush.msra.mxu0 %v1684
        %1708 = vmatmul.f32.gmra.mxu0 %v1472
        %v1709 = vpop.f32.mrf.mxu0
        %v1710 = vadd.f32 0.0, %v1709
        %1711 = vdwg.mxu0
        %s1712 = scalar_lea.vmem %s6, 32
        %v1713 = vld [vmem:[%s1712] sm:$0xff]
        %v1715 = vsel %vm1526, %v1713, 0
        %1717 = vmatpush.msra.mxu0 0.0
        %1718 = vmatpush.msra.mxu0 0.0
        %1719 = vmatpush.msra.mxu0 0.0
        %1720 = vmatpush.msra.mxu0 0.0
        %1721 = vmatpush.msra.mxu0 0.0
        %1722 = vmatpush.msra.mxu0 0.0
        %1723 = vmatpush.msra.mxu0 0.0
        %1724 = vmatpush.msra.mxu0 0.0
        %1725 = vmatpush.msra.mxu0 0.0
        %1726 = vmatpush.msra.mxu0 0.0
        %1727 = vmatpush.msra.mxu0 0.0
        %1728 = vmatpush.msra.mxu0 0.0
        %1729 = vmatpush.msra.mxu0 0.0
        %1730 = vmatpush.msra.mxu0 0.0
        %1731 = vmatpush.msra.mxu0 0.0
        %1732 = vmatpush.msra.mxu0 %v1710
        %1733 = vmatmul.f32.gmra.mxu0 %v1715
        %v1734 = vpop.f32.mrf.mxu0
        %v1735 = vadd.f32 0.0, %v1734
        %1736 = vdwg.mxu0
        %v1737 = vadd.f32 %v1682, %v1735
        %s1738 = scalar_lea.vmem %s2, 320
        %v1739 = vld [vmem:[%s1738] sm:$0xff]
        %v1740 = vld [vmem:[%s1738 + $0x8] sm:$0xff]
        %v1741 = vld [vmem:[%s1738 + $0x10] sm:$0xff]
        %v1742 = vld [vmem:[%s1738 + $0x18] sm:$0xff]
        %v1743 = vld [vmem:[%s1738 + $0x20] sm:$0xff]
        %v1744 = vld [vmem:[%s1738 + $0x28] sm:$0xff]
        %v1745 = vld [vmem:[%s1738 + $0x30] sm:$0xff]
        %v1746 = vld [vmem:[%s1738 + $0x38] sm:$0xff]
        %1747 = vmatpush.msra.mxu0 0.0
        %1748 = vmatpush.msra.mxu0 0.0
        %1749 = vmatpush.msra.mxu0 0.0
        %1750 = vmatpush.msra.mxu0 0.0
        %1751 = vmatpush.msra.mxu0 0.0
        %1752 = vmatpush.msra.mxu0 0.0
        %1753 = vmatpush.msra.mxu0 0.0
        %1754 = vmatpush.msra.mxu0 0.0
        %1755 = vmatpush.msra.mxu0 %v1746
        %1756 = vmatpush.msra.mxu0 %v1745
        %1757 = vmatpush.msra.mxu0 %v1744
        %1758 = vmatpush.msra.mxu0 %v1743
        %1759 = vmatpush.msra.mxu0 %v1742
        %1760 = vmatpush.msra.mxu0 %v1741
        %1761 = vmatpush.msra.mxu0 %v1740
        %1762 = vmatpush.msra.mxu0 %v1739
        %1763 = vmatmul.f32.gmra.mxu0 %v1472
        %v1764 = vpop.f32.mrf.mxu0
        %v1765 = vadd.f32 0.0, %v1764
        %1766 = vdwg.mxu0
        %s1767 = scalar_lea.vmem %s6, 40
        %v1768 = vld [vmem:[%s1767] sm:$0xff]
        %v1770 = vsel %vm1526, %v1768, 0
        %1772 = vmatpush.msra.mxu0 0.0
        %1773 = vmatpush.msra.mxu0 0.0
        %1774 = vmatpush.msra.mxu0 0.0
        %1775 = vmatpush.msra.mxu0 0.0
        %1776 = vmatpush.msra.mxu0 0.0
        %1777 = vmatpush.msra.mxu0 0.0
        %1778 = vmatpush.msra.mxu0 0.0
        %1779 = vmatpush.msra.mxu0 0.0
        %1780 = vmatpush.msra.mxu0 0.0
        %1781 = vmatpush.msra.mxu0 0.0
        %1782 = vmatpush.msra.mxu0 0.0
        %1783 = vmatpush.msra.mxu0 0.0
        %1784 = vmatpush.msra.mxu0 0.0
        %1785 = vmatpush.msra.mxu0 0.0
        %1786 = vmatpush.msra.mxu0 0.0
        %1787 = vmatpush.msra.mxu0 %v1765
        %1788 = vmatmul.f32.gmra.mxu0 %v1770
        %v1789 = vpop.f32.mrf.mxu0
        %v1790 = vadd.f32 0.0, %v1789
        %1791 = vdwg.mxu0
        %v1792 = vadd.f32 %v1737, %v1790
        %s1793 = scalar_lea.vmem %s2, 384
        %v1794 = vld [vmem:[%s1793] sm:$0xff]
        %v1795 = vld [vmem:[%s1793 + $0x8] sm:$0xff]
        %v1796 = vld [vmem:[%s1793 + $0x10] sm:$0xff]
        %v1797 = vld [vmem:[%s1793 + $0x18] sm:$0xff]
        %v1798 = vld [vmem:[%s1793 + $0x20] sm:$0xff]
        %v1799 = vld [vmem:[%s1793 + $0x28] sm:$0xff]
        %v1800 = vld [vmem:[%s1793 + $0x30] sm:$0xff]
        %v1801 = vld [vmem:[%s1793 + $0x38] sm:$0xff]
        %1802 = vmatpush.msra.mxu0 0.0
        %1803 = vmatpush.msra.mxu0 0.0
        %1804 = vmatpush.msra.mxu0 0.0
        %1805 = vmatpush.msra.mxu0 0.0
        %1806 = vmatpush.msra.mxu0 0.0
        %1807 = vmatpush.msra.mxu0 0.0
        %1808 = vmatpush.msra.mxu0 0.0
        %1809 = vmatpush.msra.mxu0 0.0
        %1810 = vmatpush.msra.mxu0 %v1801
        %1811 = vmatpush.msra.mxu0 %v1800
        %1812 = vmatpush.msra.mxu0 %v1799
        %1813 = vmatpush.msra.mxu0 %v1798
        %1814 = vmatpush.msra.mxu0 %v1797
        %1815 = vmatpush.msra.mxu0 %v1796
        %1816 = vmatpush.msra.mxu0 %v1795
        %1817 = vmatpush.msra.mxu0 %v1794
        %1818 = vmatmul.f32.gmra.mxu0 %v1472
        %v1819 = vpop.f32.mrf.mxu0
        %v1820 = vadd.f32 0.0, %v1819
        %1821 = vdwg.mxu0
        %s1822 = scalar_lea.vmem %s6, 48
        %v1823 = vld [vmem:[%s1822] sm:$0xff]
        %v1825 = vsel %vm1526, %v1823, 0
        %1827 = vmatpush.msra.mxu0 0.0
        %1828 = vmatpush.msra.mxu0 0.0
        %1829 = vmatpush.msra.mxu0 0.0
        %1830 = vmatpush.msra.mxu0 0.0
        %1831 = vmatpush.msra.mxu0 0.0
        %1832 = vmatpush.msra.mxu0 0.0
        %1833 = vmatpush.msra.mxu0 0.0
        %1834 = vmatpush.msra.mxu0 0.0
        %1835 = vmatpush.msra.mxu0 0.0
        %1836 = vmatpush.msra.mxu0 0.0
        %1837 = vmatpush.msra.mxu0 0.0
        %1838 = vmatpush.msra.mxu0 0.0
        %1839 = vmatpush.msra.mxu0 0.0
        %1840 = vmatpush.msra.mxu0 0.0
        %1841 = vmatpush.msra.mxu0 0.0
        %1842 = vmatpush.msra.mxu0 %v1820
        %1843 = vmatmul.f32.gmra.mxu0 %v1825
        %v1844 = vpop.f32.mrf.mxu0
        %v1845 = vadd.f32 0.0, %v1844
        %1846 = vdwg.mxu0
        %v1847 = vadd.f32 %v1792, %v1845
        %s1848 = scalar_lea.vmem %s2, 448
        %v1849 = vld [vmem:[%s1848] sm:$0xff]
        %v1850 = vld [vmem:[%s1848 + $0x8] sm:$0xff]
        %v1851 = vld [vmem:[%s1848 + $0x10] sm:$0xff]
        %v1852 = vld [vmem:[%s1848 + $0x18] sm:$0xff]
        %v1853 = vld [vmem:[%s1848 + $0x20] sm:$0xff]
        %v1854 = vld [vmem:[%s1848 + $0x28] sm:$0xff]
        %v1855 = vld [vmem:[%s1848 + $0x30] sm:$0xff]
        %v1856 = vld [vmem:[%s1848 + $0x38] sm:$0xff]
        %1857 = vmatpush.msra.mxu0 0.0
        %1858 = vmatpush.msra.mxu0 0.0
        %1859 = vmatpush.msra.mxu0 0.0
        %1860 = vmatpush.msra.mxu0 0.0
        %1861 = vmatpush.msra.mxu0 0.0
        %1862 = vmatpush.msra.mxu0 0.0
        %1863 = vmatpush.msra.mxu0 0.0
        %1864 = vmatpush.msra.mxu0 0.0
        %1865 = vmatpush.msra.mxu0 %v1856
        %1866 = vmatpush.msra.mxu0 %v1855
        %1867 = vmatpush.msra.mxu0 %v1854
        %1868 = vmatpush.msra.mxu0 %v1853
        %1869 = vmatpush.msra.mxu0 %v1852
        %1870 = vmatpush.msra.mxu0 %v1851
        %1871 = vmatpush.msra.mxu0 %v1850
        %1872 = vmatpush.msra.mxu0 %v1849
        %1873 = vmatmul.f32.gmra.mxu0 %v1472
        %v1874 = vpop.f32.mrf.mxu0
        %v1875 = vadd.f32 0.0, %v1874
        %1876 = vdwg.mxu0
        %s1877 = scalar_lea.vmem %s6, 56
        %v1878 = vld [vmem:[%s1877] sm:$0xff]
        %v1880 = vsel %vm1526, %v1878, 0
        %1882 = vmatpush.msra.mxu0 0.0
        %1883 = vmatpush.msra.mxu0 0.0
        %1884 = vmatpush.msra.mxu0 0.0
        %1885 = vmatpush.msra.mxu0 0.0
        %1886 = vmatpush.msra.mxu0 0.0
        %1887 = vmatpush.msra.mxu0 0.0
        %1888 = vmatpush.msra.mxu0 0.0
        %1889 = vmatpush.msra.mxu0 0.0
        %1890 = vmatpush.msra.mxu0 0.0
        %1891 = vmatpush.msra.mxu0 0.0
        %1892 = vmatpush.msra.mxu0 0.0
        %1893 = vmatpush.msra.mxu0 0.0
        %1894 = vmatpush.msra.mxu0 0.0
        %1895 = vmatpush.msra.mxu0 0.0
        %1896 = vmatpush.msra.mxu0 0.0
        %1897 = vmatpush.msra.mxu0 %v1875
        %1898 = vmatmul.f32.gmra.mxu0 %v1880
        %v1899 = vpop.f32.mrf.mxu0
        %v1900 = vadd.f32 0.0, %v1899
        %1901 = vdwg.mxu0
        %v1902 = vadd.f32 %v1847, %v1900
        %s1903 = scalar_lea.vmem %s2, 512
        %v1904 = vld [vmem:[%s1903] sm:$0xff]
        %v1905 = vld [vmem:[%s1903 + $0x8] sm:$0xff]
        %v1906 = vld [vmem:[%s1903 + $0x10] sm:$0xff]
        %v1907 = vld [vmem:[%s1903 + $0x18] sm:$0xff]
        %v1908 = vld [vmem:[%s1903 + $0x20] sm:$0xff]
        %v1909 = vld [vmem:[%s1903 + $0x28] sm:$0xff]
        %v1910 = vld [vmem:[%s1903 + $0x30] sm:$0xff]
        %v1911 = vld [vmem:[%s1903 + $0x38] sm:$0xff]
        %1912 = vmatpush.msra.mxu0 0.0
        %1913 = vmatpush.msra.mxu0 0.0
        %1914 = vmatpush.msra.mxu0 0.0
        %1915 = vmatpush.msra.mxu0 0.0
        %1916 = vmatpush.msra.mxu0 0.0
        %1917 = vmatpush.msra.mxu0 0.0
        %1918 = vmatpush.msra.mxu0 0.0
        %1919 = vmatpush.msra.mxu0 0.0
        %1920 = vmatpush.msra.mxu0 %v1911
        %1921 = vmatpush.msra.mxu0 %v1910
        %1922 = vmatpush.msra.mxu0 %v1909
        %1923 = vmatpush.msra.mxu0 %v1908
        %1924 = vmatpush.msra.mxu0 %v1907
        %1925 = vmatpush.msra.mxu0 %v1906
        %1926 = vmatpush.msra.mxu0 %v1905
        %1927 = vmatpush.msra.mxu0 %v1904
        %1928 = vmatmul.f32.gmra.mxu0 %v1472
        %v1929 = vpop.f32.mrf.mxu0
        %v1930 = vadd.f32 0.0, %v1929
        %1931 = vdwg.mxu0
        %s1932 = scalar_lea.vmem %s6, 64
        %v1933 = vld [vmem:[%s1932] sm:$0xff]
        %v1935 = vsel %vm1526, %v1933, 0
        %1937 = vmatpush.msra.mxu0 0.0
        %1938 = vmatpush.msra.mxu0 0.0
        %1939 = vmatpush.msra.mxu0 0.0
        %1940 = vmatpush.msra.mxu0 0.0
        %1941 = vmatpush.msra.mxu0 0.0
        %1942 = vmatpush.msra.mxu0 0.0
        %1943 = vmatpush.msra.mxu0 0.0
        %1944 = vmatpush.msra.mxu0 0.0
        %1945 = vmatpush.msra.mxu0 0.0
        %1946 = vmatpush.msra.mxu0 0.0
        %1947 = vmatpush.msra.mxu0 0.0
        %1948 = vmatpush.msra.mxu0 0.0
        %1949 = vmatpush.msra.mxu0 0.0
        %1950 = vmatpush.msra.mxu0 0.0
        %1951 = vmatpush.msra.mxu0 0.0
        %1952 = vmatpush.msra.mxu0 %v1930
        %1953 = vmatmul.f32.gmra.mxu0 %v1935
        %v1954 = vpop.f32.mrf.mxu0
        %v1955 = vadd.f32 0.0, %v1954
        %1956 = vdwg.mxu0
        %v1957 = vadd.f32 %v1902, %v1955
        %v1958 = vld [vmem:[%s7] sm:$0xff]
        %1960 = vset.pattern.permute.xlu0 0
        %1961 = vperm.xlu0 %1960, %v1958
        %v1962 = vpop.permute.xlu0 %1961
        %v1964 = vadd.f32 %v1957, %v1962
        %v1965 = vmax.f32 %v1964, 0.0
        %vm1966 = vcmask 130048
        %1967 = vst.msk [vmem:[%s480] sm:$0xff] %vm1966, %v1965
        %v1968 = vld [vmem:[%s8] sm:$0x7]
        %v1969 = vld [vmem:[%s9] sm:$0x7]
        %1971 = vset.pattern.permute.xlu0 0
        %1972 = vperm.xlu0 %1971, %v1969
        %v1973 = vpop.permute.xlu0 %1972
        %v1976 = vsel %vm1526, %v1968, 0
        %1978 = vmatpush.msra.mxu0 0.0
        %1979 = vmatpush.msra.mxu0 0.0
        %1980 = vmatpush.msra.mxu0 0.0
        %1981 = vmatpush.msra.mxu0 0.0
        %1982 = vmatpush.msra.mxu0 0.0
        %1983 = vmatpush.msra.mxu0 0.0
        %1984 = vmatpush.msra.mxu0 0.0
        %1985 = vmatpush.msra.mxu0 0.0
        %1986 = vmatpush.msra.mxu0 0.0
        %1987 = vmatpush.msra.mxu0 0.0
        %1988 = vmatpush.msra.mxu0 0.0
        %1989 = vmatpush.msra.mxu0 0.0
        %1990 = vmatpush.msra.mxu0 0.0
        %1991 = vmatpush.msra.mxu0 0.0
        %1992 = vmatpush.msra.mxu0 0.0
        %1993 = vmatpush.msra.mxu0 %v1965
        %1994 = vmatmul.f32.gmra.mxu0 %v1976
        %v1995 = vpop.f32.mrf.mxu0
        %v1996 = vadd.f32 %v1973, %v1995
        %1997 = vdwg.mxu0
        %v1998 = vld [vmem:[%s3] sm:$0xff]
        %v1999 = vld [vmem:[%s3 + $0x8] sm:$0xff]
        %v2000 = vld [vmem:[%s3 + $0x10] sm:$0xff]
        %v2001 = vld [vmem:[%s3 + $0x18] sm:$0xff]
        %v2003 = vsel %vm1966, %v1996, 0
        %2005 = vmatpush.msra.mxu0 0.0
        %2006 = vmatpush.msra.mxu0 0.0
        %2007 = vmatpush.msra.mxu0 0.0
        %2008 = vmatpush.msra.mxu0 0.0
        %2009 = vmatpush.msra.mxu0 0.0
        %2010 = vmatpush.msra.mxu0 0.0
        %2011 = vmatpush.msra.mxu0 0.0
        %2012 = vmatpush.msra.mxu0 0.0
        %2013 = vmatpush.msra.mxu0 0.0
        %2014 = vmatpush.msra.mxu0 0.0
        %2015 = vmatpush.msra.mxu0 0.0
        %2016 = vmatpush.msra.mxu0 0.0
        %2017 = vmatpush.msra.mxu0 0.0
        %2018 = vmatpush.msra.mxu0 0.0
        %2019 = vmatpush.msra.mxu0 %v2000
        %2020 = vmatpush.msra.mxu0 %v1998
        %2021 = vmatmul.f32.gmra.mxu0 %v2003
        %v2022 = vpop.f32.mrf.mxu0
        %v2023 = vadd.f32 0.0, %v2022
        %2024 = vdwg.mxu0
        %2025 = vmatpush.msra.mxu0 0.0
        %2026 = vmatpush.msra.mxu0 0.0
        %2027 = vmatpush.msra.mxu0 0.0
        %2028 = vmatpush.msra.mxu0 0.0
        %2029 = vmatpush.msra.mxu0 0.0
        %2030 = vmatpush.msra.mxu0 0.0
        %2031 = vmatpush.msra.mxu0 0.0
        %2032 = vmatpush.msra.mxu0 0.0
        %2033 = vmatpush.msra.mxu0 0.0
        %2034 = vmatpush.msra.mxu0 0.0
        %2035 = vmatpush.msra.mxu0 0.0
        %2036 = vmatpush.msra.mxu0 0.0
        %2037 = vmatpush.msra.mxu0 0.0
        %2038 = vmatpush.msra.mxu0 0.0
        %2039 = vmatpush.msra.mxu0 %v2001
        %2040 = vmatpush.msra.mxu0 %v1999
        %2041 = vmatmul.f32.gmra.mxu0 %v2003
        %v2042 = vpop.f32.mrf.mxu0
        %v2043 = vadd.f32 0.0, %v2042
        %2044 = vdwg.mxu0
        %v2045 = vmul.f32 %v2023, %v2023
        %v2046 = vmul.f32 %v2043, %v2043
        %v2047 = vsel %vm655, %v2045, 0.0
        %v2048 = vrot.slane %v2047, 4
        %v2049 = vadd.f32 %v2047, %v2048
        %v2050 = vrot.slane %v2049, 2
        %v2051 = vadd.f32 %v2049, %v2050
        %v2052 = vrot.slane %v2051, 1
        %v2053 = vadd.f32 %v2051, %v2052
        %v2054 = vsel %vm655, %v2046, 0.0
        %v2055 = vrot.slane %v2054, 4
        %v2056 = vadd.f32 %v2054, %v2055
        %v2057 = vrot.slane %v2056, 2
        %v2058 = vadd.f32 %v2056, %v2057
        %v2059 = vrot.slane %v2058, 1
        %v2060 = vadd.f32 %v2058, %v2059
        %v2061 = vmax.f32 %v2053, 1e-24
        %v2062 = vmax.f32 %v2060, 1e-24
        %v2063 = vrsqrt.pop %v2061
        %v2064 = vmul.f32 %v2063, %v2061
        %v2065 = vmul.f32 %v2064, %v2063
        %v2066 = vmul.f32 0.5, %v2065
        %v2067 = vsub.f32 1.5, %v2066
        %v2068 = vmul.f32 %v2063, %v2067
        %vm2069 = vweird.f32 %v2061
        %vm2070 = vweird.f32 %v2063
        %vm2071 = vmor %vm2069, %vm2070
        %v2072 = vsel %vm2071, %v2063, %v2068
        %v2073 = vrsqrt.pop %v2062
        %v2074 = vmul.f32 %v2073, %v2062
        %v2075 = vmul.f32 %v2074, %v2073
        %v2076 = vmul.f32 0.5, %v2075
        %v2077 = vsub.f32 1.5, %v2076
        %v2078 = vmul.f32 %v2073, %v2077
        %vm2079 = vweird.f32 %v2062
        %vm2080 = vweird.f32 %v2073
        %vm2081 = vmor %vm2079, %vm2080
        %v2082 = vsel %vm2081, %v2073, %v2078
        %v2083 = vmul.f32 %v2023, %v2072
        %v2084 = vmul.f32 %v2043, %v2082
        %v2087 = vrot.slane %v2084, 4
        %vm2088 = vcmask 1043456
        %v2089 = vsel %vm2088, %v2083, %v2087
        %2091 = vst [vmem:[%s490] sm:$0x77] %v2089
        %v2092 = vld [vmem:[%s10] sm:$0x1]
        %v2093 = vld [vmem:[#allocation2] sm:$0x1]
        %2095 = vset.pattern.permute.xlu0 0
        %2096 = vperm.xlu0 %2095, %v2093
        %v2097 = vpop.permute.xlu0 %2096
        %v2099 = vperm.slane %v2097, 0
        %v2101 = vsel %vm1526, %v2092, 0
        %2103 = vmatpush.msra.mxu0 0.0
        %2104 = vmatpush.msra.mxu0 0.0
        %2105 = vmatpush.msra.mxu0 0.0
        %2106 = vmatpush.msra.mxu0 0.0
        %2107 = vmatpush.msra.mxu0 0.0
        %2108 = vmatpush.msra.mxu0 0.0
        %2109 = vmatpush.msra.mxu0 0.0
        %2110 = vmatpush.msra.mxu0 0.0
        %2111 = vmatpush.msra.mxu0 0.0
        %2112 = vmatpush.msra.mxu0 0.0
        %2113 = vmatpush.msra.mxu0 0.0
        %2114 = vmatpush.msra.mxu0 0.0
        %2115 = vmatpush.msra.mxu0 0.0
        %2116 = vmatpush.msra.mxu0 0.0
        %2117 = vmatpush.msra.mxu0 0.0
        %2118 = vmatpush.msra.mxu0 %v1965
        %2119 = vmatmul.f32.gmra.mxu0 %v2101
        %v2120 = vpop.f32.mrf.mxu0
        %v2121 = vadd.f32 %v2099, %v2120
        %2122 = vdwg.mxu0
        %v2123 = vld [vmem:[%s3] sm:$0xff]
        %v2124 = vld [vmem:[%s3 + $0x8] sm:$0xff]
        %v2125 = vld [vmem:[%s3 + $0x10] sm:$0xff]
        %v2126 = vld [vmem:[%s3 + $0x18] sm:$0xff]
        %v2128 = vsel %vm1966, %v2121, 0
        %2130 = vmatpush.msra.mxu0 0.0
        %2131 = vmatpush.msra.mxu0 0.0
        %2132 = vmatpush.msra.mxu0 0.0
        %2133 = vmatpush.msra.mxu0 0.0
        %2134 = vmatpush.msra.mxu0 0.0
        %2135 = vmatpush.msra.mxu0 0.0
        %2136 = vmatpush.msra.mxu0 0.0
        %2137 = vmatpush.msra.mxu0 0.0
        %2138 = vmatpush.msra.mxu0 0.0
        %2139 = vmatpush.msra.mxu0 0.0
        %2140 = vmatpush.msra.mxu0 0.0
        %2141 = vmatpush.msra.mxu0 0.0
        %2142 = vmatpush.msra.mxu0 0.0
        %2143 = vmatpush.msra.mxu0 0.0
        %2144 = vmatpush.msra.mxu0 %v2125
        %2145 = vmatpush.msra.mxu0 %v2123
        %2146 = vmatmul.f32.gmra.mxu0 %v2128
        %v2147 = vpop.f32.mrf.mxu0
        %v2148 = vadd.f32 0.0, %v2147
        %2149 = vdwg.mxu0
        %2150 = vmatpush.msra.mxu0 0.0
        %2151 = vmatpush.msra.mxu0 0.0
        %2152 = vmatpush.msra.mxu0 0.0
        %2153 = vmatpush.msra.mxu0 0.0
        %2154 = vmatpush.msra.mxu0 0.0
        %2155 = vmatpush.msra.mxu0 0.0
        %2156 = vmatpush.msra.mxu0 0.0
        %2157 = vmatpush.msra.mxu0 0.0
        %2158 = vmatpush.msra.mxu0 0.0
        %2159 = vmatpush.msra.mxu0 0.0
        %2160 = vmatpush.msra.mxu0 0.0
        %2161 = vmatpush.msra.mxu0 0.0
        %2162 = vmatpush.msra.mxu0 0.0
        %2163 = vmatpush.msra.mxu0 0.0
        %2164 = vmatpush.msra.mxu0 %v2126
        %2165 = vmatpush.msra.mxu0 %v2124
        %2166 = vmatmul.f32.gmra.mxu0 %v2128
        %v2167 = vpop.f32.mrf.mxu0
        %v2168 = vadd.f32 0.0, %v2167
        %2169 = vdwg.mxu0
        %v2172 = vrot.slane %v2168, 7
        %vm2173 = vcmask 1040384
        %v2174 = vsel %vm2173, %v2148, %v2172
        %v2176 = vlaneseq
        %vm2177 = vcmp.ge.s32.totalorder %v2176, 0
        %vm2178 = vcmp.lt.s32.totalorder %v2176, 256
        %vm2179 = vmand %vm2177, %vm2178
        %2180 = vst.msk [vmem:[%s473] sm:$0x3] %vm2179, %v2174
        %p2181 = scmp.lt.s32.totalorder %s34, 1
        %s2182 = scalar_select %p2181, %s34, 1
        %s2183 = smul.addr %s2182, 2
        %s2184 = smul.addr %s2183, 4
        %s2185 = scalar_lea.vmem %s12, %s2184
        %s2186 = sand.u32 %s325, 1
        %s2187 = scalar_lea.sflag [#allocation4], %s2186
        %s2188 = sand.u32 %s325, 1
        %s2189 = smul.addr %s2188, 2
        %s2190 = scalar_lea.vmem [#allocation3], %s2189
        %s2191 = sand.u32 %s351, 1
        %s2192 = scalar_lea.sflag [#allocation6], %s2191
        %s2193 = sand.u32 %s351, 1
        %s2194 = smul.addr %s2193, 8
        %s2195 = scalar_lea.vmem [#allocation5], %s2194
        // Predicated region
        $region69: #{tpu_custom_call.1} parent=67 // pred_check
          %p2196 = pneg %p309
        $region70: #{tpu_custom_call.1} parent=67 // pred_check_branch
          %2198 = sbr.rel (%p2196) target = $region72
        $region71: #{tpu_custom_call.1} parent=67 // pred_region
          _
        $region72: #{tpu_custom_call.1} parent=67 // pred_fallthru
          _
        // Predicated region
        $region73: #{tpu_custom_call.1} parent=67 // pred_check
          %p2199 = pneg %p335
        $region74: #{tpu_custom_call.1} parent=67 // pred_check_branch
          %2201 = sbr.rel (%p2199) target = $region76
        $region75: #{tpu_custom_call.1} parent=67 // pred_region
          %2203 = vsyncadd %s2187, 0
          %s2204 = smul.addr %s34, 2
          %s2205 = scalar_lea.hbm %s13, %s2204
          %s2207 = sshll.u32 %s2190, 4
          %s2208 = int_to_ptr.vmem [resolvable:$true] %s2207
          %s2209 = sshll.u32 %s2205, 4
          %s2210 = int_to_ptr.hbm [resolvable:$true] %s2209
          %2212 = dma.vmem_to_hbm [thread:$0]  %s2208, 32, %s2210, %s2187
        $region76: #{tpu_custom_call.1} parent=67 // pred_fallthru
          _
        // Predicated region
        $region77: #{tpu_custom_call.1} parent=67 // pred_check
          %p2213 = pneg %p361
        $region78: #{tpu_custom_call.1} parent=67 // pred_check_branch
          %2215 = sbr.rel (%p2213) target = $region80
        $region79: #{tpu_custom_call.1} parent=67 // pred_region
          %2217 = vsyncadd %s2192, 0
          %s2218 = smul.addr %s34, 8
          %s2219 = scalar_lea.hbm %s14, %s2218
          %s2221 = sshll.u32 %s2195, 4
          %s2222 = int_to_ptr.vmem [resolvable:$true] %s2221
          %s2223 = sshll.u32 %s2219, 4
          %s2224 = int_to_ptr.hbm [resolvable:$true] %s2223
          %2226 = dma.vmem_to_hbm [thread:$0]  %s2222, 128, %s2224, %s2192
        $region80: #{tpu_custom_call.1} parent=67 // pred_fallthru
          _
      $region68: #{tpu_custom_call.1} parent=5 // pred_fallthru
        _
      %p2227 = scmp.le.s32.totalorder 2, %s29
      // Predicated region
      $region81: #{tpu_custom_call.1} parent=5 // pred_check
        %p2228 = pneg %p2227
      $region82: #{tpu_custom_call.1} parent=5 // pred_check_branch
        %2230 = sbr.rel (%p2228) target = $region84
      $region83: #{tpu_custom_call.1} parent=5 // pred_region
        %s2231 = ssub.s32 %s29, 2
        // Predicated region
        $region85: #{tpu_custom_call.1} parent=83 // pred_check
          %p2232 = pneg %p315
        $region86: #{tpu_custom_call.1} parent=83 // pred_check_branch
          %2234 = sbr.rel (%p2232) target = $region88
        $region87: #{tpu_custom_call.1} parent=83 // pred_region
          %p2235 = scmp.lt.s32.totalorder %s35, 1
          %s2236 = scalar_select %p2235, %s35, 1
          %s2237 = smul.addr %s2236, 2
          %s2238 = smul.addr %s2237, 4
          %s2239 = scalar_lea.vmem %s12, %s2238
        $region88: #{tpu_custom_call.1} parent=83 // pred_fallthru
          _
        // Predicated region
        $region89: #{tpu_custom_call.1} parent=83 // pred_check
          %p2240 = pneg %p341
        $region90: #{tpu_custom_call.1} parent=83 // pred_check_branch
          %2242 = sbr.rel (%p2240) target = $region92
        $region91: #{tpu_custom_call.1} parent=83 // pred_region
          %s2243 = sand.u32 %s326, 1
          %s2244 = scalar_lea.sflag [#allocation4], %s2243
          %s2245 = sand.u32 %s326, 1
          %s2246 = smul.addr %s2245, 2
          %s2247 = scalar_lea.vmem [#allocation3], %s2246
          %2249 = dma.done %s2244, 32
        $region92: #{tpu_custom_call.1} parent=83 // pred_fallthru
          _
        // Predicated region
        $region93: #{tpu_custom_call.1} parent=83 // pred_check
          %p2250 = pneg %p367
        $region94: #{tpu_custom_call.1} parent=83 // pred_check_branch
          %2252 = sbr.rel (%p2250) target = $region96
        $region95: #{tpu_custom_call.1} parent=83 // pred_region
          %s2253 = sand.u32 %s352, 1
          %s2254 = scalar_lea.sflag [#allocation6], %s2253
          %s2255 = sand.u32 %s352, 1
          %s2256 = smul.addr %s2255, 8
          %s2257 = scalar_lea.vmem [#allocation5], %s2256
          %2259 = dma.done %s2254, 128
        $region96: #{tpu_custom_call.1} parent=83 // pred_fallthru
          _
      $region84: #{tpu_custom_call.1} parent=5 // pred_fallthru
        _
    $region6: #{tpu_custom_call.1} parent=1 // loop_footer
      %s33 = sadd.s32 1, %s29
    $region7: #{tpu_custom_call.1} parent=1 // loop_footer_branch
      %28 = sbr.rel target = $region3
    $region8: #{tpu_custom_call.1} parent=1 // loop_exit
      _
    %2260 = vsyncpa [#allocation4], 1
    %s2261 = scalar_lea.sflag [#allocation4], 1
    %2262 = vsyncpa %s2261, 1
    %2263 = vsyncpa [#allocation6], 1
    %s2264 = scalar_lea.sflag [#allocation6], 1
    %2265 = vsyncpa %s2264, 1

</llo_original>
